<compile_context>
chip_gen: v6e
topology: v6e:2x2x1
jax: 0.10.0
libtpu: 0.0.40
codegen_flags: <defaults>
</compile_context>

<pallas_src>
import jax
import jax.numpy as jnp
from jax.experimental import pallas as pl
from jax.experimental.pallas import tpu as pltpu

N_WINDOWS = 10   # fixed by the module
N_HIDDEN = 8     # fixed by the module


def _round_up(x, m):
    return (x + m - 1) // m * m


def _cdiv(a, b):
    return (a + b - 1) // b


def _tranad_kernel(src_ref,      # (W*F, tb)  batch-on-lanes src slab
                   we1sc_ref,    # (2H, W*F)  [we1_src ; we1_c]
                   we2_ref,      # (n, H)
                   wda_ref,      # (2H, n)    [wd1a ; wd2a]
                   wdb_ref,      # (4F, H)    [wd1b ; wd2b]
                   wfc_ref,      # (F, 2F)
                   bias_ref,     # (3H + n + 5F, 1)
                   out_ref):     # (2F, tb) = [x1 ; x2]
    H = we2_ref.shape[1]
    n = we2_ref.shape[0]
    F = wfc_ref.shape[0]
    WF = src_ref.shape[0]
    W = WF // F

    src = src_ref[...]                                    # (WF, tb), lane-dense load

    # Static, sublane-aligned views into the packed weight operands.
    we1s = we1sc_ref[0:H, :]                              # (H, WF)
    we1c = we1sc_ref[H:2 * H, :]                          # (H, WF)
    we2 = we2_ref[...]
    wd1a = wda_ref[0:H, :]
    wd2a = wda_ref[H:2 * H, :]
    wd1b = wdb_ref[0:2 * F, :]
    wd2b = wdb_ref[2 * F:4 * F, :]
    wfc = wfc_ref[...]

    o = 0
    be1 = bias_ref[o:o + H, :];      o += H
    bd1a = bias_ref[o:o + H, :];     o += H
    bd2a = bias_ref[o:o + H, :];     o += H
    be2 = bias_ref[o:o + n, :];      o += n
    bd1b = bias_ref[o:o + 2 * F, :]; o += 2 * F
    bd2b = bias_ref[o:o + 2 * F, :]; o += 2 * F
    bfc = bias_ref[o:o + F, :]

    def mm(w, x):
        return jnp.dot(w, x, preferred_element_type=jnp.float32)

    def relu(x):
        return jnp.maximum(x, 0.0)

    def sigmoid(z):
        # Numerically-stable sigmoid; divide via the EUP reciprocal path.
        e = jnp.exp(-jnp.abs(z))
        s = e * pl.reciprocal(1.0 + e, approx=False)
        return jnp.where(z >= 0.0, 1.0 - s, s)

    # ----- pass 1: c = 0, so only the src half of encoder L1 contributes ---------
    acc_src = mm(we1s, src)                               # (H, tb)
    h1 = relu(acc_src + be1)
    enc1 = relu(mm(we2, h1) + be2)                        # (n, tb)
    g1 = relu(mm(wd1a, enc1) + bd1a)                      # (H, tb)
    d1 = relu(mm(wd1b, g1) + bd1b)                        # (2F, tb)
    x1 = sigmoid(mm(wfc, d1) + bfc)                       # (F, tb)

    # ----- pass 2: c[w] = (x1 - src_w)^2 for all windows at once; reuse acc_src ---
    x1_rep = jnp.tile(x1, (W, 1))                         # sublane block-repeat -> (WF, tb)
    c_flat = (x1_rep - src) ** 2
    acc2 = acc_src + mm(we1c, c_flat)                     # (H, tb)
    h2 = relu(acc2 + be1)
    enc2 = relu(mm(we2, h2) + be2)
    g2 = relu(mm(wd2a, enc2) + bd2a)
    d2 = relu(mm(wd2b, g2) + bd2b)
    x2 = sigmoid(mm(wfc, d2) + bfc)                       # (F, tb)

    out_ref[0:F, :] = x1                                  # both stores lane-dense
    out_ref[F:2 * F, :] = x2


def init_params(key, n_features):
    """PyTorch-style uniform(-1/sqrt(fan_in), 1/sqrt(fan_in)) init, deterministic."""
    F, H, W = n_features, N_HIDDEN, N_WINDOWS
    n = 2 * F * W

    def linear(k, fan_in, fan_out):
        k1, k2 = jax.random.split(k)
        bound = 1.0 / (fan_in ** 0.5)
        w = jax.random.uniform(k1, (fan_out, fan_in), jnp.float32, -bound, bound)
        b = jax.random.uniform(k2, (fan_out,), jnp.float32, -bound, bound)
        return w, b

    ks = jax.random.split(key, 7)
    p = {}
    p["we1"], p["be1"] = linear(ks[0], n, H)          # encoder: Linear(n, 8)
    p["we2"], p["be2"] = linear(ks[1], H, n)          # encoder: Linear(8, n)
    p["wd1a"], p["bd1a"] = linear(ks[2], n, H)        # decoder1: Linear(n, 8)
    p["wd1b"], p["bd1b"] = linear(ks[3], H, 2 * F)    # decoder1: Linear(8, 2F)
    p["wd2a"], p["bd2a"] = linear(ks[4], n, H)        # decoder2: Linear(n, 8)
    p["wd2b"], p["bd2b"] = linear(ks[5], H, 2 * F)    # decoder2: Linear(8, 2F)
    p["wfc"], p["bfc"] = linear(ks[6], 2 * F, F)      # fc: Linear(2F, F)
    return p


@jax.jit
def tranad_forward(src, target, params):
    """src: (W, B, F) float32 (target unused, as in the PyTorch forward)."""
    del target
    W, B, F = src.shape
    H = N_HIDDEN
    n = 2 * F * W
    WF = W * F

    # Batch-on-lanes slab: row (w*F + f), column b — matches the src half of the
    # PyTorch cat + permute + flatten ordering.
    src_flat = jnp.transpose(src, (0, 2, 1)).reshape(WF, B).astype(jnp.float32)

    # Encoder L1 weight (H, n): split its columns into the src / c halves (the
    # flattened layout interleaves [src_w | c_w] per window).  All weights stay in
    # their native (out, in) orientation because the kernel computes W @ X.
    we1 = params["we1"].reshape(H, W, 2 * F)
    we1s = we1[:, :, :F].reshape(H, WF)
    we1c = we1[:, :, F:].reshape(H, WF)

    we1sc = jnp.concatenate([we1s, we1c], axis=0)                       # (2H, WF)
    wda = jnp.concatenate([params["wd1a"], params["wd2a"]], axis=0)     # (2H, n)
    wdb = jnp.concatenate([params["wd1b"], params["wd2b"]], axis=0)     # (4F, H)
    bias = jnp.concatenate([
        params["be1"], params["bd1a"], params["bd2a"], params["be2"],
        params["bd1b"], params["bd2b"], params["bfc"]]).reshape(-1, 1)  # (3H+n+5F, 1)

    weights = (we1sc, params["we2"], wda, wdb, params["wfc"], bias)

    # Batch tiling: batch lives on lanes, so blocks are multiples of 128 lanes.
    # Blocks are balanced across the grid (minimal padding), capped at 2048 rows
    # (~4 MiB live f32 per step, safe for v5e's 16 MiB scoped-VMEM default); for
    # >= 512 rows use >= 2 steps so both v7x TensorCores get work.
    LANE = 128
    TB_MAX = 2048
    b_ceil = _round_up(max(B, 1), LANE)
    num_blocks = _cdiv(b_ceil, TB_MAX)
    if b_ceil >= 4 * LANE:
        num_blocks = max(num_blocks, 2)
    tb = _round_up(_cdiv(b_ceil, num_blocks), LANE)
    b_pad = num_blocks * tb
    if b_pad != B:
        src_flat = jnp.pad(src_flat, ((0, 0), (0, b_pad - B)))

    def resident(a):  # weights stay in VMEM on block (0, 0) for every grid step
        return pl.BlockSpec(a.shape, lambda i: (0, 0))

    out = pl.pallas_call(
        _tranad_kernel,
        out_shape=jax.ShapeDtypeStruct((2 * F, b_pad), jnp.float32),
        grid_spec=pltpu.PrefetchScalarGridSpec(
            num_scalar_prefetch=0,
            grid=(num_blocks,),
            in_specs=[pl.BlockSpec((WF, tb), lambda i: (0, i))]
                     + [resident(w) for w in weights],
            out_specs=pl.BlockSpec((2 * F, tb), lambda i: (0, i)),
        ),
        compiler_params=pltpu.CompilerParams(
            dimension_semantics=("parallel",)),
    )(src_flat, *weights)

    x1 = out[:F, :B].T.reshape(1, B, F)
    x2 = out[F:, :B].T.reshape(1, B, F)
    return x1, x2


def reference_forward(src, params):
    """Pure-JAX reference mirroring the PyTorch module exactly."""
    W, B, F = src.shape

    def seq(x, w1, b1, w2, b2):
        h = jax.nn.relu(x @ w1.T + b1)
        return jax.nn.relu(h @ w2.T + b2)

    def encode(src_, c_):
        x = jnp.concatenate([src_, c_], axis=2)                      # (W, B, 2F)
        x = jnp.transpose(x, (1, 0, 2)).reshape(B, -1)               # (B, n)
        return seq(x, params["we1"], params["be1"], params["we2"], params["be2"])

    c = jnp.zeros_like(src)
    e1 = encode(src, c)
    d1 = seq(e1, params["wd1a"], params["bd1a"], params["wd1b"], params["bd1b"])
    d1 = d1.reshape(-1, 1, 2 * F).transpose(1, 0, 2)                 # (1, B, 2F)
    x1 = jax.nn.sigmoid(d1 @ params["wfc"].T + params["bfc"])        # (1, B, F)

    c = (x1 - src) ** 2
    e2 = encode(src, c)
    d2 = seq(e2, params["wd2a"], params["bd2a"], params["wd2b"], params["bd2b"])
    d2 = d2.reshape(-1, 1, 2 * F).transpose(1, 0, 2)
    x2 = jax.nn.sigmoid(d2 @ params["wfc"].T + params["bfc"])
    return x1, x2


if __name__ == "__main__":
    key = jax.random.PRNGKey(0)
    k_src, k_src2, k_par = jax.random.split(key, 3)

    n_features = 8
    params = init_params(k_par, n_features)

    # Small case (B=2 -> single 128-lane block, heavily padded).
    batch = 2
    src = jax.random.normal(k_src, (N_WINDOWS, batch, n_features), jnp.float32)
    target = jnp.zeros_like(src)   # unused by forward, kept for signature fidelity
    x1, x2 = tranad_forward(src, target, params)
    jax.block_until_ready((x1, x2))
    r1, r2 = reference_forward(src, params)
    assert x1.shape == (1, batch, n_features) and x2.shape == (1, batch, n_features)
    assert jnp.allclose(x1, r1, atol=1e-5, rtol=1e-5), "x1 mismatch vs reference (B=2)"
    assert jnp.allclose(x2, r2, atol=1e-5, rtol=1e-5), "x2 mismatch vs reference (B=2)"

    # Larger case exercising the multi-step 'parallel' grid (B=1000 -> 2 x 512 lanes).
    batch2 = 1000
    src2 = jax.random.normal(k_src2, (N_WINDOWS, batch2, n_features), jnp.float32)
    y1, y2 = tranad_forward(src2, jnp.zeros_like(src2), params)
    jax.block_until_ready((y1, y2))
    q1, q2 = reference_forward(src2, params)
    assert jnp.allclose(y1, q1, atol=1e-5, rtol=1e-5), "x1 mismatch vs reference (B=1000)"
    assert jnp.allclose(y2, q2, atol=1e-5, rtol=1e-5), "x2 mismatch vs reference (B=1000)"

    print("KERNEL_OK")
</pallas_src>

<mosaic_0001>
module attributes {stable_mosaic.version = 11 : i64} {
  func.func @_tranad_kernel(%arg0: i32, %arg1: memref<80x128xf32, #tpu.memory_space<vmem>>, %arg2: memref<16x80xf32, #tpu.memory_space<vmem>>, %arg3: memref<160x8xf32, #tpu.memory_space<vmem>>, %arg4: memref<16x160xf32, #tpu.memory_space<vmem>>, %arg5: memref<32x8xf32, #tpu.memory_space<vmem>>, %arg6: memref<8x16xf32, #tpu.memory_space<vmem>>, %arg7: memref<224x1xf32, #tpu.memory_space<vmem>>, %arg8: memref<16x128xf32, #tpu.memory_space<vmem>>) attributes {dimension_semantics = [#tpu.dimension_semantics<parallel>], iteration_bounds = array<i64: 1>, scalar_prefetch = 0 : i64, scratch_operands = 0 : i64, tpu.core_type = #tpu.core_type<tc>, window_params = [{transform_indices = @transform_0, window_bounds = array<i64: 80, 128>}, {pipeline_mode = #tpu.pipeline_mode<synchronous>, transform_indices = @transform_1, window_bounds = array<i64: 16, 80>}, {pipeline_mode = #tpu.pipeline_mode<synchronous>, transform_indices = @transform_2, window_bounds = array<i64: 160, 8>}, {pipeline_mode = #tpu.pipeline_mode<synchronous>, transform_indices = @transform_3, window_bounds = array<i64: 16, 160>}, {pipeline_mode = #tpu.pipeline_mode<synchronous>, transform_indices = @transform_4, window_bounds = array<i64: 32, 8>}, {pipeline_mode = #tpu.pipeline_mode<synchronous>, transform_indices = @transform_5, window_bounds = array<i64: 8, 16>}, {pipeline_mode = #tpu.pipeline_mode<synchronous>, transform_indices = @transform_6, window_bounds = array<i64: 224, 1>}, {transform_indices = @transform_7, window_bounds = array<i64: 16, 128>}]} {
    %c0 = arith.constant 0 : index
    %c0_0 = arith.constant 0 : index
    %0 = vector.load %arg1[%c0, %c0_0] : memref<80x128xf32, #tpu.memory_space<vmem>>, vector<80x128xf32>
    %c0_1 = arith.constant 0 : index
    %c0_2 = arith.constant 0 : index
    %1 = vector.load %arg2[%c0_1, %c0_2] : memref<16x80xf32, #tpu.memory_space<vmem>>, vector<8x80xf32>
    %c8 = arith.constant 8 : index
    %c0_3 = arith.constant 0 : index
    %2 = vector.load %arg2[%c8, %c0_3] : memref<16x80xf32, #tpu.memory_space<vmem>>, vector<8x80xf32>
    %c0_4 = arith.constant 0 : index
    %c0_5 = arith.constant 0 : index
    %3 = vector.load %arg3[%c0_4, %c0_5] : memref<160x8xf32, #tpu.memory_space<vmem>>, vector<160x8xf32>
    %c0_6 = arith.constant 0 : index
    %c0_7 = arith.constant 0 : index
    %4 = vector.load %arg4[%c0_6, %c0_7] : memref<16x160xf32, #tpu.memory_space<vmem>>, vector<8x160xf32>
    %c8_8 = arith.constant 8 : index
    %c0_9 = arith.constant 0 : index
    %5 = vector.load %arg4[%c8_8, %c0_9] : memref<16x160xf32, #tpu.memory_space<vmem>>, vector<8x160xf32>
    %c0_10 = arith.constant 0 : index
    %c0_11 = arith.constant 0 : index
    %6 = vector.load %arg5[%c0_10, %c0_11] : memref<32x8xf32, #tpu.memory_space<vmem>>, vector<16x8xf32>
    %c16 = arith.constant 16 : index
    %c0_12 = arith.constant 0 : index
    %7 = vector.load %arg5[%c16, %c0_12] : memref<32x8xf32, #tpu.memory_space<vmem>>, vector<16x8xf32>
    %c0_13 = arith.constant 0 : index
    %c0_14 = arith.constant 0 : index
    %8 = vector.load %arg6[%c0_13, %c0_14] : memref<8x16xf32, #tpu.memory_space<vmem>>, vector<8x16xf32>
    %c0_15 = arith.constant 0 : index
    %c0_16 = arith.constant 0 : index
    %9 = vector.load %arg7[%c0_15, %c0_16] : memref<224x1xf32, #tpu.memory_space<vmem>>, vector<8x1xf32>
    %c8_17 = arith.constant 8 : index
    %c0_18 = arith.constant 0 : index
    %10 = vector.load %arg7[%c8_17, %c0_18] : memref<224x1xf32, #tpu.memory_space<vmem>>, vector<8x1xf32>
    %c16_19 = arith.constant 16 : index
    %c0_20 = arith.constant 0 : index
    %11 = vector.load %arg7[%c16_19, %c0_20] : memref<224x1xf32, #tpu.memory_space<vmem>>, vector<8x1xf32>
    %c24 = arith.constant 24 : index
    %c0_21 = arith.constant 0 : index
    %12 = vector.load %arg7[%c24, %c0_21] : memref<224x1xf32, #tpu.memory_space<vmem>>, vector<160x1xf32>
    %c184 = arith.constant 184 : index
    %c0_22 = arith.constant 0 : index
    %13 = vector.load %arg7[%c184, %c0_22] : memref<224x1xf32, #tpu.memory_space<vmem>>, vector<16x1xf32>
    %c200 = arith.constant 200 : index
    %c0_23 = arith.constant 0 : index
    %14 = vector.load %arg7[%c200, %c0_23] : memref<224x1xf32, #tpu.memory_space<vmem>>, vector<16x1xf32>
    %c216 = arith.constant 216 : index
    %c0_24 = arith.constant 0 : index
    %15 = vector.load %arg7[%c216, %c0_24] : memref<224x1xf32, #tpu.memory_space<vmem>>, vector<8x1xf32>
    %cst = arith.constant dense<0.000000e+00> : vector<8x128xf32>
    %16 = tpu.matmul %1, %0, %cst {dimension_numbers = #tpu.dot_dimension_numbers<[1], [0], [0], [1], [0, 0, 1, 1], [], []>} : vector<8x80xf32>, vector<80x128xf32>, vector<8x128xf32> -> vector<8x128xf32>
    %17 = vector.broadcast %9 : vector<8x1xf32> to vector<8x128xf32>
    %18 = arith.addf %16, %17 : vector<8x128xf32>
    %cst_25 = arith.constant 0.000000e+00 : f32
    %19 = vector.broadcast %cst_25 : f32 to vector<8x128xf32>
    %20 = arith.maximumf %18, %19 : vector<8x128xf32>
    %cst_26 = arith.constant dense<0.000000e+00> : vector<160x128xf32>
    %21 = tpu.matmul %3, %20, %cst_26 {dimension_numbers = #tpu.dot_dimension_numbers<[1], [0], [0], [1], [0, 0, 1, 1], [], []>} : vector<160x8xf32>, vector<8x128xf32>, vector<160x128xf32> -> vector<160x128xf32>
    %22 = vector.broadcast %12 : vector<160x1xf32> to vector<160x128xf32>
    %23 = arith.addf %21, %22 : vector<160x128xf32>
    %cst_27 = arith.constant 0.000000e+00 : f32
    %24 = vector.broadcast %cst_27 : f32 to vector<160x128xf32>
    %25 = arith.maximumf %23, %24 : vector<160x128xf32>
    %cst_28 = arith.constant dense<0.000000e+00> : vector<8x128xf32>
    %26 = tpu.matmul %4, %25, %cst_28 {dimension_numbers = #tpu.dot_dimension_numbers<[1], [0], [0], [1], [0, 0, 1, 1], [], []>} : vector<8x160xf32>, vector<160x128xf32>, vector<8x128xf32> -> vector<8x128xf32>
    %27 = vector.broadcast %10 : vector<8x1xf32> to vector<8x128xf32>
    %28 = arith.addf %26, %27 : vector<8x128xf32>
    %cst_29 = arith.constant 0.000000e+00 : f32
    %29 = vector.broadcast %cst_29 : f32 to vector<8x128xf32>
    %30 = arith.maximumf %28, %29 : vector<8x128xf32>
    %cst_30 = arith.constant dense<0.000000e+00> : vector<16x128xf32>
    %31 = tpu.matmul %6, %30, %cst_30 {dimension_numbers = #tpu.dot_dimension_numbers<[1], [0], [0], [1], [0, 0, 1, 1], [], []>} : vector<16x8xf32>, vector<8x128xf32>, vector<16x128xf32> -> vector<16x128xf32>
    %32 = vector.broadcast %13 : vector<16x1xf32> to vector<16x128xf32>
    %33 = arith.addf %31, %32 : vector<16x128xf32>
    %cst_31 = arith.constant 0.000000e+00 : f32
    %34 = vector.broadcast %cst_31 : f32 to vector<16x128xf32>
    %35 = arith.maximumf %33, %34 : vector<16x128xf32>
    %cst_32 = arith.constant dense<0.000000e+00> : vector<8x128xf32>
    %36 = tpu.matmul %8, %35, %cst_32 {dimension_numbers = #tpu.dot_dimension_numbers<[1], [0], [0], [1], [0, 0, 1, 1], [], []>} : vector<8x16xf32>, vector<16x128xf32>, vector<8x128xf32> -> vector<8x128xf32>
    %37 = vector.broadcast %15 : vector<8x1xf32> to vector<8x128xf32>
    %38 = arith.addf %36, %37 : vector<8x128xf32>
    %39 = math.absf %38 : vector<8x128xf32>
    %cst_33 = arith.constant 0.000000e+00 : f32
    %40 = vector.broadcast %cst_33 : f32 to vector<8x128xf32>
    %41 = arith.subf %40, %39 : vector<8x128xf32>
    %42 = math.exp %41 : vector<8x128xf32>
    %cst_34 = arith.constant 1.000000e+00 : f32
    %43 = vector.broadcast %cst_34 : f32 to vector<8x128xf32>
    %44 = arith.addf %43, %42 : vector<8x128xf32>
    %45 = tpu.reciprocal %44 : vector<8x128xf32> -> vector<8x128xf32>
    %46 = arith.mulf %42, %45 : vector<8x128xf32>
    %cst_35 = arith.constant 0.000000e+00 : f32
    %47 = vector.broadcast %cst_35 : f32 to vector<8x128xf32>
    %48 = arith.cmpf oge, %38, %47 : vector<8x128xf32>
    %cst_36 = arith.constant 1.000000e+00 : f32
    %49 = vector.broadcast %cst_36 : f32 to vector<8x128xf32>
    %50 = arith.subf %49, %46 : vector<8x128xf32>
    %51 = arith.select %48, %50, %46 : vector<8x128xi1>, vector<8x128xf32>
    %52 = tpu.concatenate %51, %51, %51, %51, %51, %51, %51, %51, %51, %51 in 0 : vector<8x128xf32>, vector<8x128xf32>, vector<8x128xf32>, vector<8x128xf32>, vector<8x128xf32>, vector<8x128xf32>, vector<8x128xf32>, vector<8x128xf32>, vector<8x128xf32>, vector<8x128xf32> -> vector<80x128xf32>
    %53 = arith.subf %52, %0 : vector<80x128xf32>
    %54 = arith.mulf %53, %53 : vector<80x128xf32>
    %cst_37 = arith.constant dense<0.000000e+00> : vector<8x128xf32>
    %55 = tpu.matmul %2, %54, %cst_37 {dimension_numbers = #tpu.dot_dimension_numbers<[1], [0], [0], [1], [0, 0, 1, 1], [], []>} : vector<8x80xf32>, vector<80x128xf32>, vector<8x128xf32> -> vector<8x128xf32>
    %56 = arith.addf %16, %55 : vector<8x128xf32>
    %57 = vector.broadcast %9 : vector<8x1xf32> to vector<8x128xf32>
    %58 = arith.addf %56, %57 : vector<8x128xf32>
    %cst_38 = arith.constant 0.000000e+00 : f32
    %59 = vector.broadcast %cst_38 : f32 to vector<8x128xf32>
    %60 = arith.maximumf %58, %59 : vector<8x128xf32>
    %cst_39 = arith.constant dense<0.000000e+00> : vector<160x128xf32>
    %61 = tpu.matmul %3, %60, %cst_39 {dimension_numbers = #tpu.dot_dimension_numbers<[1], [0], [0], [1], [0, 0, 1, 1], [], []>} : vector<160x8xf32>, vector<8x128xf32>, vector<160x128xf32> -> vector<160x128xf32>
    %62 = vector.broadcast %12 : vector<160x1xf32> to vector<160x128xf32>
    %63 = arith.addf %61, %62 : vector<160x128xf32>
    %cst_40 = arith.constant 0.000000e+00 : f32
    %64 = vector.broadcast %cst_40 : f32 to vector<160x128xf32>
    %65 = arith.maximumf %63, %64 : vector<160x128xf32>
    %cst_41 = arith.constant dense<0.000000e+00> : vector<8x128xf32>
    %66 = tpu.matmul %5, %65, %cst_41 {dimension_numbers = #tpu.dot_dimension_numbers<[1], [0], [0], [1], [0, 0, 1, 1], [], []>} : vector<8x160xf32>, vector<160x128xf32>, vector<8x128xf32> -> vector<8x128xf32>
    %67 = vector.broadcast %11 : vector<8x1xf32> to vector<8x128xf32>
    %68 = arith.addf %66, %67 : vector<8x128xf32>
    %cst_42 = arith.constant 0.000000e+00 : f32
    %69 = vector.broadcast %cst_42 : f32 to vector<8x128xf32>
    %70 = arith.maximumf %68, %69 : vector<8x128xf32>
    %cst_43 = arith.constant dense<0.000000e+00> : vector<16x128xf32>
    %71 = tpu.matmul %7, %70, %cst_43 {dimension_numbers = #tpu.dot_dimension_numbers<[1], [0], [0], [1], [0, 0, 1, 1], [], []>} : vector<16x8xf32>, vector<8x128xf32>, vector<16x128xf32> -> vector<16x128xf32>
    %72 = vector.broadcast %14 : vector<16x1xf32> to vector<16x128xf32>
    %73 = arith.addf %71, %72 : vector<16x128xf32>
    %cst_44 = arith.constant 0.000000e+00 : f32
    %74 = vector.broadcast %cst_44 : f32 to vector<16x128xf32>
    %75 = arith.maximumf %73, %74 : vector<16x128xf32>
    %cst_45 = arith.constant dense<0.000000e+00> : vector<8x128xf32>
    %76 = tpu.matmul %8, %75, %cst_45 {dimension_numbers = #tpu.dot_dimension_numbers<[1], [0], [0], [1], [0, 0, 1, 1], [], []>} : vector<8x16xf32>, vector<16x128xf32>, vector<8x128xf32> -> vector<8x128xf32>
    %77 = vector.broadcast %15 : vector<8x1xf32> to vector<8x128xf32>
    %78 = arith.addf %76, %77 : vector<8x128xf32>
    %79 = math.absf %78 : vector<8x128xf32>
    %cst_46 = arith.constant 0.000000e+00 : f32
    %80 = vector.broadcast %cst_46 : f32 to vector<8x128xf32>
    %81 = arith.subf %80, %79 : vector<8x128xf32>
    %82 = math.exp %81 : vector<8x128xf32>
    %cst_47 = arith.constant 1.000000e+00 : f32
    %83 = vector.broadcast %cst_47 : f32 to vector<8x128xf32>
    %84 = arith.addf %83, %82 : vector<8x128xf32>
    %85 = tpu.reciprocal %84 : vector<8x128xf32> -> vector<8x128xf32>
    %86 = arith.mulf %82, %85 : vector<8x128xf32>
    %cst_48 = arith.constant 0.000000e+00 : f32
    %87 = vector.broadcast %cst_48 : f32 to vector<8x128xf32>
    %88 = arith.cmpf oge, %78, %87 : vector<8x128xf32>
    %cst_49 = arith.constant 1.000000e+00 : f32
    %89 = vector.broadcast %cst_49 : f32 to vector<8x128xf32>
    %90 = arith.subf %89, %86 : vector<8x128xf32>
    %91 = arith.select %88, %90, %86 : vector<8x128xi1>, vector<8x128xf32>
    %c0_50 = arith.constant 0 : index
    %c0_51 = arith.constant 0 : index
    %92 = vector.load %arg8[%c0_50, %c0_51] : memref<16x128xf32, #tpu.memory_space<vmem>>, vector<8x128xf32>
    tpu.vector_store %arg8[%c0_50, %c0_51], %51 {strides = array<i32>} : memref<16x128xf32, #tpu.memory_space<vmem>>, vector<8x128xf32>,
    %c8_52 = arith.constant 8 : index
    %c0_53 = arith.constant 0 : index
    %93 = vector.load %arg8[%c8_52, %c0_53] : memref<16x128xf32, #tpu.memory_space<vmem>>, vector<8x128xf32>
    tpu.vector_store %arg8[%c8_52, %c0_53], %91 {strides = array<i32>} : memref<16x128xf32, #tpu.memory_space<vmem>>, vector<8x128xf32>,
    return
  }
  func.func @transform_0(%arg0: i32) -> (i32, i32) {
    %c0_i32 = arith.constant 0 : i32
    %c0_i32_0 = arith.constant 0 : i32
    return %c0_i32, %arg0 : i32, i32
  }
  func.func @transform_1(%arg0: i32) -> (i32, i32) {
    %c0_i32 = arith.constant 0 : i32
    %c0_i32_0 = arith.constant 0 : i32
    %c0_i32_1 = arith.constant 0 : i32
    return %c0_i32, %c0_i32_0 : i32, i32
  }
  func.func @transform_2(%arg0: i32) -> (i32, i32) {
    %c0_i32 = arith.constant 0 : i32
    %c0_i32_0 = arith.constant 0 : i32
    %c0_i32_1 = arith.constant 0 : i32
    return %c0_i32, %c0_i32_0 : i32, i32
  }
  func.func @transform_3(%arg0: i32) -> (i32, i32) {
    %c0_i32 = arith.constant 0 : i32
    %c0_i32_0 = arith.constant 0 : i32
    %c0_i32_1 = arith.constant 0 : i32
    return %c0_i32, %c0_i32_0 : i32, i32
  }
  func.func @transform_4(%arg0: i32) -> (i32, i32) {
    %c0_i32 = arith.constant 0 : i32
    %c0_i32_0 = arith.constant 0 : i32
    %c0_i32_1 = arith.constant 0 : i32
    return %c0_i32, %c0_i32_0 : i32, i32
  }
  func.func @transform_5(%arg0: i32) -> (i32, i32) {
    %c0_i32 = arith.constant 0 : i32
    %c0_i32_0 = arith.constant 0 : i32
    %c0_i32_1 = arith.constant 0 : i32
    return %c0_i32, %c0_i32_0 : i32, i32
  }
  func.func @transform_6(%arg0: i32) -> (i32, i32) {
    %c0_i32 = arith.constant 0 : i32
    %c0_i32_0 = arith.constant 0 : i32
    %c0_i32_1 = arith.constant 0 : i32
    return %c0_i32, %c0_i32_0 : i32, i32
  }
  func.func @transform_7(%arg0: i32) -> (i32, i32) {
    %c0_i32 = arith.constant 0 : i32
    %c0_i32_0 = arith.constant 0 : i32
    return %c0_i32, %arg0 : i32, i32
  }
}

</mosaic_0001>

<llo_original>
// kernel: tranad_forward.1
$region0: #{tranad_forward.1}
  #allocation0 [shape = 'u32[]', space=smem, size = 0x4, offset = 0x4, fixed_abs, tag = 'smem constant byte address 0x4 - core index']
  #allocation1 [shape = 'u32[144,128]{1,0:T(1,128)}', space=vmem, size = 0x12000, scoped, tag = 'internal scratch']
  %s0 = inlined_call_operand.vmem [shape: f32[80,128], index: 0, kind: input, shape index: {}]
  %s1 = inlined_call_operand.vmem [shape: f32[16,80], index: 1, kind: input, shape index: {}]
  %s2 = inlined_call_operand.vmem [shape: f32[160,8], index: 2, kind: input, shape index: {}]
  %s3 = inlined_call_operand.vmem [shape: f32[16,160], index: 3, kind: input, shape index: {}]
  %s4 = inlined_call_operand.vmem [shape: f32[32,8], index: 4, kind: input, shape index: {}]
  %s5 = inlined_call_operand.vmem [shape: f32[8,16], index: 5, kind: input, shape index: {}]
  %s6 = inlined_call_operand.vmem [shape: f32[224,1], index: 6, kind: input, shape index: {}]
  %s7 = inlined_call_operand.vmem [shape: f32[16,128], index: 7, kind: output, shape index: {}]
  %s8 = sld [smem:[#allocation0]]
  $region38: #{tranad_forward.1} parent=0
    _
  %s10 = ssub.s32 1, %s8
  %s11 = scalar_select 0, %s10, %s8
  // Predicated region
  $region2: #{tranad_forward.1} parent=0 // pred_check
    _
  $region3: #{tranad_forward.1} parent=0 // pred_check_branch
    %13 = sbr.rel (0) target = $region5
  $region4: #{tranad_forward.1} parent=0 // pred_region
    _
  $region5: #{tranad_forward.1} parent=0 // pred_fallthru
    _
  // Predicated region
  $region6: #{tranad_forward.1} parent=0 // pred_check
    _
  $region7: #{tranad_forward.1} parent=0 // pred_check_branch
    %15 = sbr.rel (0) target = $region9
  $region8: #{tranad_forward.1} parent=0 // pred_region
    _
  $region9: #{tranad_forward.1} parent=0 // pred_fallthru
    _
  // Predicated region
  $region10: #{tranad_forward.1} parent=0 // pred_check
    _
  $region11: #{tranad_forward.1} parent=0 // pred_check_branch
    %17 = sbr.rel (0) target = $region13
  $region12: #{tranad_forward.1} parent=0 // pred_region
    _
  $region13: #{tranad_forward.1} parent=0 // pred_fallthru
    _
  // Predicated region
  $region14: #{tranad_forward.1} parent=0 // pred_check
    _
  $region15: #{tranad_forward.1} parent=0 // pred_check_branch
    %19 = sbr.rel (0) target = $region17
  $region16: #{tranad_forward.1} parent=0 // pred_region
    _
  $region17: #{tranad_forward.1} parent=0 // pred_fallthru
    _
  // Predicated region
  $region18: #{tranad_forward.1} parent=0 // pred_check
    _
  $region19: #{tranad_forward.1} parent=0 // pred_check_branch
    %21 = sbr.rel (0) target = $region21
  $region20: #{tranad_forward.1} parent=0 // pred_region
    _
  $region21: #{tranad_forward.1} parent=0 // pred_fallthru
    _
  // Predicated region
  $region22: #{tranad_forward.1} parent=0 // pred_check
    _
  $region23: #{tranad_forward.1} parent=0 // pred_check_branch
    %23 = sbr.rel (0) target = $region25
  $region24: #{tranad_forward.1} parent=0 // pred_region
    _
  $region25: #{tranad_forward.1} parent=0 // pred_fallthru
    _
  // Predicated region
  $region26: #{tranad_forward.1} parent=0 // pred_check
    _
  $region27: #{tranad_forward.1} parent=0 // pred_check_branch
    %25 = sbr.rel (0) target = $region29
  $region28: #{tranad_forward.1} parent=0 // pred_region
    _
  $region29: #{tranad_forward.1} parent=0 // pred_fallthru
    _
  %v26 = vld [vmem:[%s0] sm:$0xff]
  %v27 = vld [vmem:[%s0 + $0x8] sm:$0xff]
  %v28 = vld [vmem:[%s0 + $0x10] sm:$0xff]
  %v29 = vld [vmem:[%s0 + $0x18] sm:$0xff]
  %v30 = vld [vmem:[%s0 + $0x20] sm:$0xff]
  %v31 = vld [vmem:[%s0 + $0x28] sm:$0xff]
  %v32 = vld [vmem:[%s0 + $0x30] sm:$0xff]
  %v33 = vld [vmem:[%s0 + $0x38] sm:$0xff]
  %v34 = vld [vmem:[%s0 + $0x40] sm:$0xff]
  %v35 = vld [vmem:[%s0 + $0x48] sm:$0xff]
  %v36 = vld [vmem:[%s1] sm:$0xff]
  %v37 = vld [vmem:[%s1 + $0x8] sm:$0xff]
  %v38 = vld [vmem:[%s2] sm:$0xff]
  %v39 = vld [vmem:[%s2 + $0x8] sm:$0xff]
  %v40 = vld [vmem:[%s2 + $0x10] sm:$0xff]
  %v41 = vld [vmem:[%s2 + $0x18] sm:$0xff]
  %v42 = vld [vmem:[%s2 + $0x20] sm:$0xff]
  %v43 = vld [vmem:[%s2 + $0x28] sm:$0xff]
  %v44 = vld [vmem:[%s2 + $0x30] sm:$0xff]
  %v45 = vld [vmem:[%s2 + $0x38] sm:$0xff]
  %v46 = vld [vmem:[%s2 + $0x40] sm:$0xff]
  %v47 = vld [vmem:[%s2 + $0x48] sm:$0xff]
  %v48 = vld [vmem:[%s2 + $0x50] sm:$0xff]
  %v49 = vld [vmem:[%s2 + $0x58] sm:$0xff]
  %v50 = vld [vmem:[%s2 + $0x60] sm:$0xff]
  %v51 = vld [vmem:[%s2 + $0x68] sm:$0xff]
  %v52 = vld [vmem:[%s2 + $0x70] sm:$0xff]
  %v53 = vld [vmem:[%s2 + $0x78] sm:$0xff]
  %v54 = vld [vmem:[%s2 + $0x80] sm:$0xff]
  %v55 = vld [vmem:[%s2 + $0x88] sm:$0xff]
  %v56 = vld [vmem:[%s2 + $0x90] sm:$0xff]
  %v57 = vld [vmem:[%s2 + $0x98] sm:$0xff]
  %v58 = vld [vmem:[%s3] sm:$0xff]
  %v59 = vld [vmem:[%s3 + $0x8] sm:$0xff]
  %v60 = vld [vmem:[%s3 + $0x10] sm:$0xff]
  %v61 = vld [vmem:[%s3 + $0x18] sm:$0xff]
  %v62 = vld [vmem:[%s4] sm:$0xff]
  %v63 = vld [vmem:[%s4 + $0x8] sm:$0xff]
  %v64 = vld [vmem:[%s4 + $0x10] sm:$0xff]
  %v65 = vld [vmem:[%s4 + $0x18] sm:$0xff]
  %v66 = vld [vmem:[%s5] sm:$0xff]
  %v67 = vld [vmem:[%s6] sm:$0xff]
  %v68 = vld [vmem:[%s6 + $0x8] sm:$0xff]
  %v69 = vld [vmem:[%s6 + $0x10] sm:$0xff]
  %v70 = vld [vmem:[%s6 + $0x18] sm:$0xff]
  %v71 = vld [vmem:[%s6 + $0x20] sm:$0xff]
  %v72 = vld [vmem:[%s6 + $0x28] sm:$0xff]
  %v73 = vld [vmem:[%s6 + $0x30] sm:$0xff]
  %v74 = vld [vmem:[%s6 + $0x38] sm:$0xff]
  %v75 = vld [vmem:[%s6 + $0x40] sm:$0xff]
  %v76 = vld [vmem:[%s6 + $0x48] sm:$0xff]
  %v77 = vld [vmem:[%s6 + $0x50] sm:$0xff]
  %v78 = vld [vmem:[%s6 + $0x58] sm:$0xff]
  %v79 = vld [vmem:[%s6 + $0x60] sm:$0xff]
  %v80 = vld [vmem:[%s6 + $0x68] sm:$0xff]
  %v81 = vld [vmem:[%s6 + $0x70] sm:$0xff]
  %v82 = vld [vmem:[%s6 + $0x78] sm:$0xff]
  %v83 = vld [vmem:[%s6 + $0x80] sm:$0xff]
  %v84 = vld [vmem:[%s6 + $0x88] sm:$0xff]
  %v85 = vld [vmem:[%s6 + $0x90] sm:$0xff]
  %v86 = vld [vmem:[%s6 + $0x98] sm:$0xff]
  %v87 = vld [vmem:[%s6 + $0xa0] sm:$0xff]
  %v88 = vld [vmem:[%s6 + $0xa8] sm:$0xff]
  %v89 = vld [vmem:[%s6 + $0xb0] sm:$0xff]
  %v90 = vld [vmem:[%s6 + $0xb8] sm:$0xff]
  %v91 = vld [vmem:[%s6 + $0xc0] sm:$0xff]
  %v92 = vld [vmem:[%s6 + $0xc8] sm:$0xff]
  %v93 = vld [vmem:[%s6 + $0xd0] sm:$0xff]
  %v94 = vld [vmem:[%s6 + $0xd8] sm:$0xff]
  %vm95 = vcmask 654336
  %v97 = vsel %vm95, %v36, 0
  %99 = vmatprep.subr.mxu0 0.0
  %100 = vmatpush1.msra.mxu0 0.0
  %101 = vmatprep.subr.mxu0 0.0
  %102 = vmatpush1.msra.mxu0 0.0
  %103 = vmatprep.subr.mxu0 0.0
  %104 = vmatpush1.msra.mxu0 0.0
  %105 = vmatprep.subr.mxu0 0.0
  %106 = vmatpush1.msra.mxu0 0.0
  %107 = vmatprep.subr.mxu0 0.0
  %108 = vmatpush1.msra.mxu0 0.0
  %109 = vmatprep.subr.mxu0 0.0
  %110 = vmatpush1.msra.mxu0 0.0
  %111 = vmatprep.subr.mxu0 0.0
  %112 = vmatpush1.msra.mxu0 %v35
  %113 = vmatprep.subr.mxu0 0.0
  %114 = vmatpush1.msra.mxu0 %v34
  %115 = vmatprep.subr.mxu0 0.0
  %116 = vmatpush1.msra.mxu0 %v33
  %117 = vmatprep.subr.mxu0 0.0
  %118 = vmatpush1.msra.mxu0 %v32
  %119 = vmatprep.subr.mxu0 0.0
  %120 = vmatpush1.msra.mxu0 %v31
  %121 = vmatprep.subr.mxu0 0.0
  %122 = vmatpush1.msra.mxu0 %v30
  %123 = vmatprep.subr.mxu0 0.0
  %124 = vmatpush1.msra.mxu0 %v29
  %125 = vmatprep.subr.mxu0 0.0
  %126 = vmatpush1.msra.mxu0 %v28
  %127 = vmatprep.subr.mxu0 0.0
  %128 = vmatpush1.msra.mxu0 %v27
  %129 = vmatprep.subr.mxu0 0.0
  %130 = vmatpush1.msra.mxu0 %v26
  %131 = vmatprep.subr.mxu0 0.0
  %132 = vmatpush2.msra.mxu0 0.0
  %133 = vmatprep.subr.mxu0 0.0
  %134 = vmatpush2.msra.mxu0 0.0
  %135 = vmatprep.subr.mxu0 0.0
  %136 = vmatpush2.msra.mxu0 0.0
  %137 = vmatprep.subr.mxu0 0.0
  %138 = vmatpush2.msra.mxu0 0.0
  %139 = vmatprep.subr.mxu0 0.0
  %140 = vmatpush2.msra.mxu0 0.0
  %141 = vmatprep.subr.mxu0 0.0
  %142 = vmatpush2.msra.mxu0 0.0
  %143 = vmatprep.subr.mxu0 0.0
  %144 = vmatpush2.msra.mxu0 0.0
  %145 = vmatprep.subr.mxu0 0.0
  %146 = vmatpush2.msra.mxu0 0.0
  %147 = vmatprep.subr.mxu0 0.0
  %148 = vmatpush2.msra.mxu0 0.0
  %149 = vmatprep.subr.mxu0 0.0
  %150 = vmatpush2.msra.mxu0 0.0
  %151 = vmatprep.subr.mxu0 0.0
  %152 = vmatpush2.msra.mxu0 0.0
  %153 = vmatprep.subr.mxu0 0.0
  %154 = vmatpush2.msra.mxu0 0.0
  %155 = vmatprep.subr.mxu0 0.0
  %156 = vmatpush2.msra.mxu0 0.0
  %157 = vmatprep.subr.mxu0 0.0
  %158 = vmatpush2.msra.mxu0 0.0
  %159 = vmatprep.subr.mxu0 0.0
  %160 = vmatpush2.msra.mxu0 0.0
  %161 = vmatprep.subr.mxu0 0.0
  %162 = vmatpush2.msra.mxu0 0.0
  %163 = vmatprep.mubr.f32.mxu0 0.0
  %164 = vmatmul.mubr.f32.gmra.mxu0 %v97
  %v165 = vpop.f32.mrf.mxu0
  %v166 = vadd.f32 0.0, %v165
  %v167 = vpop.f32.mrf.mxu0
  %168 = vdwg.mxu0
  %170 = vset.pattern.permute.xlu0 0
  %171 = vperm.xlu0 %170, %v67
  %v172 = vpop.permute.xlu0 %171
  %v174 = vadd.f32 %v166, %v172
  %v175 = vmax.f32 %v174, 0.0
  %177 = vset.pattern.permute.xlu0 0
  %178 = vperm.xlu0 %177, %v70
  %v179 = vpop.permute.xlu0 %178
  %182 = vset.pattern.permute.xlu0 0
  %183 = vperm.xlu0 %182, %v71
  %v184 = vpop.permute.xlu0 %183
  %187 = vset.pattern.permute.xlu0 0
  %188 = vperm.xlu0 %187, %v72
  %v189 = vpop.permute.xlu0 %188
  %192 = vset.pattern.permute.xlu0 0
  %193 = vperm.xlu0 %192, %v73
  %v194 = vpop.permute.xlu0 %193
  %197 = vset.pattern.permute.xlu0 0
  %198 = vperm.xlu0 %197, %v74
  %v199 = vpop.permute.xlu0 %198
  %202 = vset.pattern.permute.xlu0 0
  %203 = vperm.xlu0 %202, %v75
  %v204 = vpop.permute.xlu0 %203
  %207 = vset.pattern.permute.xlu0 0
  %208 = vperm.xlu0 %207, %v76
  %v209 = vpop.permute.xlu0 %208
  %212 = vset.pattern.permute.xlu0 0
  %213 = vperm.xlu0 %212, %v77
  %v214 = vpop.permute.xlu0 %213
  %217 = vset.pattern.permute.xlu0 0
  %218 = vperm.xlu0 %217, %v78
  %v219 = vpop.permute.xlu0 %218
  %222 = vset.pattern.permute.xlu0 0
  %223 = vperm.xlu0 %222, %v79
  %v224 = vpop.permute.xlu0 %223
  %227 = vset.pattern.permute.xlu0 0
  %228 = vperm.xlu0 %227, %v80
  %v229 = vpop.permute.xlu0 %228
  %232 = vset.pattern.permute.xlu0 0
  %233 = vperm.xlu0 %232, %v81
  %v234 = vpop.permute.xlu0 %233
  %237 = vset.pattern.permute.xlu0 0
  %238 = vperm.xlu0 %237, %v82
  %v239 = vpop.permute.xlu0 %238
  %242 = vset.pattern.permute.xlu0 0
  %243 = vperm.xlu0 %242, %v83
  %v244 = vpop.permute.xlu0 %243
  %247 = vset.pattern.permute.xlu0 0
  %248 = vperm.xlu0 %247, %v84
  %v249 = vpop.permute.xlu0 %248
  %252 = vset.pattern.permute.xlu0 0
  %253 = vperm.xlu0 %252, %v85
  %v254 = vpop.permute.xlu0 %253
  %257 = vset.pattern.permute.xlu0 0
  %258 = vperm.xlu0 %257, %v86
  %v259 = vpop.permute.xlu0 %258
  %262 = vset.pattern.permute.xlu0 0
  %263 = vperm.xlu0 %262, %v87
  %v264 = vpop.permute.xlu0 %263
  %267 = vset.pattern.permute.xlu0 0
  %268 = vperm.xlu0 %267, %v88
  %v269 = vpop.permute.xlu0 %268
  %272 = vset.pattern.permute.xlu0 0
  %273 = vperm.xlu0 %272, %v89
  %v274 = vpop.permute.xlu0 %273
  %vm276 = vcmask 64512
  %v278 = vsel %vm276, %v38, 0
  %v281 = vsel %vm276, %v39, 0
  %v284 = vsel %vm276, %v40, 0
  %v287 = vsel %vm276, %v41, 0
  %v290 = vsel %vm276, %v42, 0
  %v293 = vsel %vm276, %v43, 0
  %v296 = vsel %vm276, %v44, 0
  %v299 = vsel %vm276, %v45, 0
  %v302 = vsel %vm276, %v46, 0
  %v305 = vsel %vm276, %v47, 0
  %v308 = vsel %vm276, %v48, 0
  %v311 = vsel %vm276, %v49, 0
  %v314 = vsel %vm276, %v50, 0
  %v317 = vsel %vm276, %v51, 0
  %v320 = vsel %vm276, %v52, 0
  %v323 = vsel %vm276, %v53, 0
  %v326 = vsel %vm276, %v54, 0
  %v329 = vsel %vm276, %v55, 0
  %v332 = vsel %vm276, %v56, 0
  %v335 = vsel %vm276, %v57, 0
  %337 = vmatprep.subr.mxu0 0.0
  %338 = vmatpush1.msra.mxu0 0.0
  %339 = vmatprep.subr.mxu0 0.0
  %340 = vmatpush1.msra.mxu0 0.0
  %341 = vmatprep.subr.mxu0 0.0
  %342 = vmatpush1.msra.mxu0 0.0
  %343 = vmatprep.subr.mxu0 0.0
  %344 = vmatpush1.msra.mxu0 0.0
  %345 = vmatprep.subr.mxu0 0.0
  %346 = vmatpush1.msra.mxu0 0.0
  %347 = vmatprep.subr.mxu0 0.0
  %348 = vmatpush1.msra.mxu0 0.0
  %349 = vmatprep.subr.mxu0 0.0
  %350 = vmatpush1.msra.mxu0 0.0
  %351 = vmatprep.subr.mxu0 0.0
  %352 = vmatpush1.msra.mxu0 0.0
  %353 = vmatprep.subr.mxu0 0.0
  %354 = vmatpush1.msra.mxu0 0.0
  %355 = vmatprep.subr.mxu0 0.0
  %356 = vmatpush1.msra.mxu0 0.0
  %357 = vmatprep.subr.mxu0 0.0
  %358 = vmatpush1.msra.mxu0 0.0
  %359 = vmatprep.subr.mxu0 0.0
  %360 = vmatpush1.msra.mxu0 0.0
  %361 = vmatprep.subr.mxu0 0.0
  %362 = vmatpush1.msra.mxu0 0.0
  %363 = vmatprep.subr.mxu0 0.0
  %364 = vmatpush1.msra.mxu0 0.0
  %365 = vmatprep.subr.mxu0 0.0
  %366 = vmatpush1.msra.mxu0 0.0
  %367 = vmatprep.subr.mxu0 0.0
  %368 = vmatpush1.msra.mxu0 %v175
  %369 = vmatprep.subr.mxu0 0.0
  %370 = vmatpush2.msra.mxu0 0.0
  %371 = vmatprep.subr.mxu0 0.0
  %372 = vmatpush2.msra.mxu0 0.0
  %373 = vmatprep.subr.mxu0 0.0
  %374 = vmatpush2.msra.mxu0 0.0
  %375 = vmatprep.subr.mxu0 0.0
  %376 = vmatpush2.msra.mxu0 0.0
  %377 = vmatprep.subr.mxu0 0.0
  %378 = vmatpush2.msra.mxu0 0.0
  %379 = vmatprep.subr.mxu0 0.0
  %380 = vmatpush2.msra.mxu0 0.0
  %381 = vmatprep.subr.mxu0 0.0
  %382 = vmatpush2.msra.mxu0 0.0
  %383 = vmatprep.subr.mxu0 0.0
  %384 = vmatpush2.msra.mxu0 0.0
  %385 = vmatprep.subr.mxu0 0.0
  %386 = vmatpush2.msra.mxu0 0.0
  %387 = vmatprep.subr.mxu0 0.0
  %388 = vmatpush2.msra.mxu0 0.0
  %389 = vmatprep.subr.mxu0 0.0
  %390 = vmatpush2.msra.mxu0 0.0
  %391 = vmatprep.subr.mxu0 0.0
  %392 = vmatpush2.msra.mxu0 0.0
  %393 = vmatprep.subr.mxu0 0.0
  %394 = vmatpush2.msra.mxu0 0.0
  %395 = vmatprep.subr.mxu0 0.0
  %396 = vmatpush2.msra.mxu0 0.0
  %397 = vmatprep.subr.mxu0 0.0
  %398 = vmatpush2.msra.mxu0 0.0
  %399 = vmatprep.subr.mxu0 0.0
  %400 = vmatpush2.msra.mxu0 0.0
  %401 = vmatprep.mubr.f32.mxu0 0.0
  %402 = vmatmul.mubr.f32.gmra.mxu0 %v278
  %v403 = vpop.f32.mrf.mxu0
  %v404 = vadd.f32 %v179, %v403
  %v405 = vpop.f32.mrf.mxu0
  %406 = vmatprep.mubr.f32.mxu0 0.0
  %407 = vmatmul.mubr.f32.gmra.mxu0 %v281
  %v408 = vpop.f32.mrf.mxu0
  %v409 = vadd.f32 %v184, %v408
  %v410 = vpop.f32.mrf.mxu0
  %411 = vmatprep.mubr.f32.mxu0 0.0
  %412 = vmatmul.mubr.f32.gmra.mxu0 %v284
  %v413 = vpop.f32.mrf.mxu0
  %v414 = vadd.f32 %v189, %v413
  %v415 = vpop.f32.mrf.mxu0
  %416 = vmatprep.mubr.f32.mxu0 0.0
  %417 = vmatmul.mubr.f32.gmra.mxu0 %v287
  %v418 = vpop.f32.mrf.mxu0
  %v419 = vadd.f32 %v194, %v418
  %v420 = vpop.f32.mrf.mxu0
  %421 = vmatprep.mubr.f32.mxu0 0.0
  %422 = vmatmul.mubr.f32.gmra.mxu0 %v290
  %v423 = vpop.f32.mrf.mxu0
  %v424 = vadd.f32 %v199, %v423
  %v425 = vpop.f32.mrf.mxu0
  %426 = vmatprep.mubr.f32.mxu0 0.0
  %427 = vmatmul.mubr.f32.gmra.mxu0 %v293
  %v428 = vpop.f32.mrf.mxu0
  %v429 = vadd.f32 %v204, %v428
  %v430 = vpop.f32.mrf.mxu0
  %431 = vmatprep.mubr.f32.mxu0 0.0
  %432 = vmatmul.mubr.f32.gmra.mxu0 %v296
  %v433 = vpop.f32.mrf.mxu0
  %v434 = vadd.f32 %v209, %v433
  %v435 = vpop.f32.mrf.mxu0
  %436 = vmatprep.mubr.f32.mxu0 0.0
  %437 = vmatmul.mubr.f32.gmra.mxu0 %v299
  %v438 = vpop.f32.mrf.mxu0
  %v439 = vadd.f32 %v214, %v438
  %v440 = vpop.f32.mrf.mxu0
  %441 = vmatprep.mubr.f32.mxu0 0.0
  %442 = vmatmul.mubr.f32.gmra.mxu0 %v302
  %v443 = vpop.f32.mrf.mxu0
  %v444 = vadd.f32 %v219, %v443
  %v445 = vpop.f32.mrf.mxu0
  %446 = vmatprep.mubr.f32.mxu0 0.0
  %447 = vmatmul.mubr.f32.gmra.mxu0 %v305
  %v448 = vpop.f32.mrf.mxu0
  %v449 = vadd.f32 %v224, %v448
  %v450 = vpop.f32.mrf.mxu0
  %451 = vmatprep.mubr.f32.mxu0 0.0
  %452 = vmatmul.mubr.f32.gmra.mxu0 %v308
  %v453 = vpop.f32.mrf.mxu0
  %v454 = vadd.f32 %v229, %v453
  %v455 = vpop.f32.mrf.mxu0
  %456 = vmatprep.mubr.f32.mxu0 0.0
  %457 = vmatmul.mubr.f32.gmra.mxu0 %v311
  %v458 = vpop.f32.mrf.mxu0
  %v459 = vadd.f32 %v234, %v458
  %v460 = vpop.f32.mrf.mxu0
  %461 = vmatprep.mubr.f32.mxu0 0.0
  %462 = vmatmul.mubr.f32.gmra.mxu0 %v314
  %v463 = vpop.f32.mrf.mxu0
  %v464 = vadd.f32 %v239, %v463
  %v465 = vpop.f32.mrf.mxu0
  %466 = vmatprep.mubr.f32.mxu0 0.0
  %467 = vmatmul.mubr.f32.gmra.mxu0 %v317
  %v468 = vpop.f32.mrf.mxu0
  %v469 = vadd.f32 %v244, %v468
  %v470 = vpop.f32.mrf.mxu0
  %471 = vmatprep.mubr.f32.mxu0 0.0
  %472 = vmatmul.mubr.f32.gmra.mxu0 %v320
  %v473 = vpop.f32.mrf.mxu0
  %v474 = vadd.f32 %v249, %v473
  %v475 = vpop.f32.mrf.mxu0
  %476 = vmatprep.mubr.f32.mxu0 0.0
  %477 = vmatmul.mubr.f32.gmra.mxu0 %v323
  %v478 = vpop.f32.mrf.mxu0
  %v479 = vadd.f32 %v254, %v478
  %v480 = vpop.f32.mrf.mxu0
  %481 = vmatprep.mubr.f32.mxu0 0.0
  %482 = vmatmul.mubr.f32.gmra.mxu0 %v326
  %v483 = vpop.f32.mrf.mxu0
  %v484 = vadd.f32 %v259, %v483
  %v485 = vpop.f32.mrf.mxu0
  %486 = vmatprep.mubr.f32.mxu0 0.0
  %487 = vmatmul.mubr.f32.gmra.mxu0 %v329
  %v488 = vpop.f32.mrf.mxu0
  %v489 = vadd.f32 %v264, %v488
  %v490 = vpop.f32.mrf.mxu0
  %491 = vmatprep.mubr.f32.mxu0 0.0
  %492 = vmatmul.mubr.f32.gmra.mxu0 %v332
  %v493 = vpop.f32.mrf.mxu0
  %v494 = vadd.f32 %v269, %v493
  %v495 = vpop.f32.mrf.mxu0
  %496 = vmatprep.mubr.f32.mxu0 0.0
  %497 = vmatmul.mubr.f32.gmra.mxu0 %v335
  %v498 = vpop.f32.mrf.mxu0
  %v499 = vadd.f32 %v274, %v498
  %v500 = vpop.f32.mrf.mxu0
  %501 = vdwg.mxu0
  %v502 = vmax.f32 %v404, 0.0
  %v503 = vmax.f32 %v409, 0.0
  %v504 = vmax.f32 %v414, 0.0
  %v505 = vmax.f32 %v419, 0.0
  %v506 = vmax.f32 %v424, 0.0
  %v507 = vmax.f32 %v429, 0.0
  %v508 = vmax.f32 %v434, 0.0
  %v509 = vmax.f32 %v439, 0.0
  %v510 = vmax.f32 %v444, 0.0
  %v511 = vmax.f32 %v449, 0.0
  %v512 = vmax.f32 %v454, 0.0
  %v513 = vmax.f32 %v459, 0.0
  %v514 = vmax.f32 %v464, 0.0
  %v515 = vmax.f32 %v469, 0.0
  %v516 = vmax.f32 %v474, 0.0
  %v517 = vmax.f32 %v479, 0.0
  %v518 = vmax.f32 %v484, 0.0
  %v519 = vmax.f32 %v489, 0.0
  %v520 = vmax.f32 %v494, 0.0
  %v521 = vmax.f32 %v499, 0.0
  %523 = vset.pattern.permute.xlu0 0
  %524 = vperm.xlu0 %523, %v68
  %v525 = vpop.permute.xlu0 %524
  %vm527 = vcmask 261120
  %v529 = vsel %vm527, %v59, 0
  %531 = vmatprep.subr.mxu0 0.0
  %532 = vmatpush1.msra.mxu0 %v517
  %533 = vmatprep.subr.mxu0 0.0
  %534 = vmatpush1.msra.mxu0 %v516
  %535 = vmatprep.subr.mxu0 0.0
  %536 = vmatpush1.msra.mxu0 %v515
  %537 = vmatprep.subr.mxu0 0.0
  %538 = vmatpush1.msra.mxu0 %v514
  %539 = vmatprep.subr.mxu0 0.0
  %540 = vmatpush1.msra.mxu0 %v513
  %541 = vmatprep.subr.mxu0 0.0
  %542 = vmatpush1.msra.mxu0 %v512
  %543 = vmatprep.subr.mxu0 0.0
  %544 = vmatpush1.msra.mxu0 %v511
  %545 = vmatprep.subr.mxu0 0.0
  %546 = vmatpush1.msra.mxu0 %v510
  %547 = vmatprep.subr.mxu0 0.0
  %548 = vmatpush1.msra.mxu0 %v509
  %549 = vmatprep.subr.mxu0 0.0
  %550 = vmatpush1.msra.mxu0 %v508
  %551 = vmatprep.subr.mxu0 0.0
  %552 = vmatpush1.msra.mxu0 %v507
  %553 = vmatprep.subr.mxu0 0.0
  %554 = vmatpush1.msra.mxu0 %v506
  %555 = vmatprep.subr.mxu0 0.0
  %556 = vmatpush1.msra.mxu0 %v505
  %557 = vmatprep.subr.mxu0 0.0
  %558 = vmatpush1.msra.mxu0 %v504
  %559 = vmatprep.subr.mxu0 0.0
  %560 = vmatpush1.msra.mxu0 %v503
  %561 = vmatprep.subr.mxu0 0.0
  %562 = vmatpush1.msra.mxu0 %v502
  %563 = vmatprep.subr.mxu0 0.0
  %564 = vmatpush2.msra.mxu0 0.0
  %565 = vmatprep.subr.mxu0 0.0
  %566 = vmatpush2.msra.mxu0 0.0
  %567 = vmatprep.subr.mxu0 0.0
  %568 = vmatpush2.msra.mxu0 0.0
  %569 = vmatprep.subr.mxu0 0.0
  %570 = vmatpush2.msra.mxu0 0.0
  %571 = vmatprep.subr.mxu0 0.0
  %572 = vmatpush2.msra.mxu0 0.0
  %573 = vmatprep.subr.mxu0 0.0
  %574 = vmatpush2.msra.mxu0 0.0
  %575 = vmatprep.subr.mxu0 0.0
  %576 = vmatpush2.msra.mxu0 0.0
  %577 = vmatprep.subr.mxu0 0.0
  %578 = vmatpush2.msra.mxu0 0.0
  %579 = vmatprep.subr.mxu0 0.0
  %580 = vmatpush2.msra.mxu0 0.0
  %581 = vmatprep.subr.mxu0 0.0
  %582 = vmatpush2.msra.mxu0 0.0
  %583 = vmatprep.subr.mxu0 0.0
  %584 = vmatpush2.msra.mxu0 0.0
  %585 = vmatprep.subr.mxu0 0.0
  %586 = vmatpush2.msra.mxu0 0.0
  %587 = vmatprep.subr.mxu0 0.0
  %588 = vmatpush2.msra.mxu0 %v521
  %589 = vmatprep.subr.mxu0 0.0
  %590 = vmatpush2.msra.mxu0 %v520
  %591 = vmatprep.subr.mxu0 0.0
  %592 = vmatpush2.msra.mxu0 %v519
  %593 = vmatprep.subr.mxu0 0.0
  %594 = vmatpush2.msra.mxu0 %v518
  %595 = vmatprep.mubr.f32.mxu0 %v529
  %596 = vmatmul.mubr.f32.gmra.mxu0 %v58
  %v597 = vpop.f32.mrf.mxu0
  %v598 = vadd.f32 %v525, %v597
  %v599 = vpop.f32.mrf.mxu0
  %600 = vdwg.mxu0
  %v601 = vmax.f32 %v598, 0.0
  %603 = vset.pattern.permute.xlu0 0
  %604 = vperm.xlu0 %603, %v90
  %v605 = vpop.permute.xlu0 %604
  %608 = vset.pattern.permute.xlu0 0
  %609 = vperm.xlu0 %608, %v91
  %v610 = vpop.permute.xlu0 %609
  %v613 = vsel %vm276, %v62, 0
  %v616 = vsel %vm276, %v63, 0
  %618 = vmatprep.subr.mxu0 0.0
  %619 = vmatpush1.msra.mxu0 0.0
  %620 = vmatprep.subr.mxu0 0.0
  %621 = vmatpush1.msra.mxu0 0.0
  %622 = vmatprep.subr.mxu0 0.0
  %623 = vmatpush1.msra.mxu0 0.0
  %624 = vmatprep.subr.mxu0 0.0
  %625 = vmatpush1.msra.mxu0 0.0
  %626 = vmatprep.subr.mxu0 0.0
  %627 = vmatpush1.msra.mxu0 0.0
  %628 = vmatprep.subr.mxu0 0.0
  %629 = vmatpush1.msra.mxu0 0.0
  %630 = vmatprep.subr.mxu0 0.0
  %631 = vmatpush1.msra.mxu0 0.0
  %632 = vmatprep.subr.mxu0 0.0
  %633 = vmatpush1.msra.mxu0 0.0
  %634 = vmatprep.subr.mxu0 0.0
  %635 = vmatpush1.msra.mxu0 0.0
  %636 = vmatprep.subr.mxu0 0.0
  %637 = vmatpush1.msra.mxu0 0.0
  %638 = vmatprep.subr.mxu0 0.0
  %639 = vmatpush1.msra.mxu0 0.0
  %640 = vmatprep.subr.mxu0 0.0
  %641 = vmatpush1.msra.mxu0 0.0
  %642 = vmatprep.subr.mxu0 0.0
  %643 = vmatpush1.msra.mxu0 0.0
  %644 = vmatprep.subr.mxu0 0.0
  %645 = vmatpush1.msra.mxu0 0.0
  %646 = vmatprep.subr.mxu0 0.0
  %647 = vmatpush1.msra.mxu0 0.0
  %648 = vmatprep.subr.mxu0 0.0
  %649 = vmatpush1.msra.mxu0 %v601
  %650 = vmatprep.subr.mxu0 0.0
  %651 = vmatpush2.msra.mxu0 0.0
  %652 = vmatprep.subr.mxu0 0.0
  %653 = vmatpush2.msra.mxu0 0.0
  %654 = vmatprep.subr.mxu0 0.0
  %655 = vmatpush2.msra.mxu0 0.0
  %656 = vmatprep.subr.mxu0 0.0
  %657 = vmatpush2.msra.mxu0 0.0
  %658 = vmatprep.subr.mxu0 0.0
  %659 = vmatpush2.msra.mxu0 0.0
  %660 = vmatprep.subr.mxu0 0.0
  %661 = vmatpush2.msra.mxu0 0.0
  %662 = vmatprep.subr.mxu0 0.0
  %663 = vmatpush2.msra.mxu0 0.0
  %664 = vmatprep.subr.mxu0 0.0
  %665 = vmatpush2.msra.mxu0 0.0
  %666 = vmatprep.subr.mxu0 0.0
  %667 = vmatpush2.msra.mxu0 0.0
  %668 = vmatprep.subr.mxu0 0.0
  %669 = vmatpush2.msra.mxu0 0.0
  %670 = vmatprep.subr.mxu0 0.0
  %671 = vmatpush2.msra.mxu0 0.0
  %672 = vmatprep.subr.mxu0 0.0
  %673 = vmatpush2.msra.mxu0 0.0
  %674 = vmatprep.subr.mxu0 0.0
  %675 = vmatpush2.msra.mxu0 0.0
  %676 = vmatprep.subr.mxu0 0.0
  %677 = vmatpush2.msra.mxu0 0.0
  %678 = vmatprep.subr.mxu0 0.0
  %679 = vmatpush2.msra.mxu0 0.0
  %680 = vmatprep.subr.mxu0 0.0
  %681 = vmatpush2.msra.mxu0 0.0
  %682 = vmatprep.mubr.f32.mxu0 0.0
  %683 = vmatmul.mubr.f32.gmra.mxu0 %v613
  %v684 = vpop.f32.mrf.mxu0
  %v685 = vadd.f32 %v605, %v684
  %v686 = vpop.f32.mrf.mxu0
  %687 = vmatprep.mubr.f32.mxu0 0.0
  %688 = vmatmul.mubr.f32.gmra.mxu0 %v616
  %v689 = vpop.f32.mrf.mxu0
  %v690 = vadd.f32 %v610, %v689
  %v691 = vpop.f32.mrf.mxu0
  %692 = vdwg.mxu0
  %v693 = vmax.f32 %v685, 0.0
  %v694 = vmax.f32 %v690, 0.0
  %696 = vset.pattern.permute.xlu0 0
  %697 = vperm.xlu0 %696, %v94
  %v698 = vpop.permute.xlu0 %697
  %vm700 = vcmask 130048
  %v702 = vsel %vm700, %v66, 0
  %704 = vmatprep.subr.mxu0 0.0
  %705 = vmatpush1.msra.mxu0 0.0
  %706 = vmatprep.subr.mxu0 0.0
  %707 = vmatpush1.msra.mxu0 0.0
  %708 = vmatprep.subr.mxu0 0.0
  %709 = vmatpush1.msra.mxu0 0.0
  %710 = vmatprep.subr.mxu0 0.0
  %711 = vmatpush1.msra.mxu0 0.0
  %712 = vmatprep.subr.mxu0 0.0
  %713 = vmatpush1.msra.mxu0 0.0
  %714 = vmatprep.subr.mxu0 0.0
  %715 = vmatpush1.msra.mxu0 0.0
  %716 = vmatprep.subr.mxu0 0.0
  %717 = vmatpush1.msra.mxu0 0.0
  %718 = vmatprep.subr.mxu0 0.0
  %719 = vmatpush1.msra.mxu0 0.0
  %720 = vmatprep.subr.mxu0 0.0
  %721 = vmatpush1.msra.mxu0 0.0
  %722 = vmatprep.subr.mxu0 0.0
  %723 = vmatpush1.msra.mxu0 0.0
  %724 = vmatprep.subr.mxu0 0.0
  %725 = vmatpush1.msra.mxu0 0.0
  %726 = vmatprep.subr.mxu0 0.0
  %727 = vmatpush1.msra.mxu0 0.0
  %728 = vmatprep.subr.mxu0 0.0
  %729 = vmatpush1.msra.mxu0 0.0
  %730 = vmatprep.subr.mxu0 0.0
  %731 = vmatpush1.msra.mxu0 0.0
  %732 = vmatprep.subr.mxu0 0.0
  %733 = vmatpush1.msra.mxu0 %v694
  %734 = vmatprep.subr.mxu0 0.0
  %735 = vmatpush1.msra.mxu0 %v693
  %736 = vmatprep.subr.mxu0 0.0
  %737 = vmatpush2.msra.mxu0 0.0
  %738 = vmatprep.subr.mxu0 0.0
  %739 = vmatpush2.msra.mxu0 0.0
  %740 = vmatprep.subr.mxu0 0.0
  %741 = vmatpush2.msra.mxu0 0.0
  %742 = vmatprep.subr.mxu0 0.0
  %743 = vmatpush2.msra.mxu0 0.0
  %744 = vmatprep.subr.mxu0 0.0
  %745 = vmatpush2.msra.mxu0 0.0
  %746 = vmatprep.subr.mxu0 0.0
  %747 = vmatpush2.msra.mxu0 0.0
  %748 = vmatprep.subr.mxu0 0.0
  %749 = vmatpush2.msra.mxu0 0.0
  %750 = vmatprep.subr.mxu0 0.0
  %751 = vmatpush2.msra.mxu0 0.0
  %752 = vmatprep.subr.mxu0 0.0
  %753 = vmatpush2.msra.mxu0 0.0
  %754 = vmatprep.subr.mxu0 0.0
  %755 = vmatpush2.msra.mxu0 0.0
  %756 = vmatprep.subr.mxu0 0.0
  %757 = vmatpush2.msra.mxu0 0.0
  %758 = vmatprep.subr.mxu0 0.0
  %759 = vmatpush2.msra.mxu0 0.0
  %760 = vmatprep.subr.mxu0 0.0
  %761 = vmatpush2.msra.mxu0 0.0
  %762 = vmatprep.subr.mxu0 0.0
  %763 = vmatpush2.msra.mxu0 0.0
  %764 = vmatprep.subr.mxu0 0.0
  %765 = vmatpush2.msra.mxu0 0.0
  %766 = vmatprep.subr.mxu0 0.0
  %767 = vmatpush2.msra.mxu0 0.0
  %768 = vmatprep.mubr.f32.mxu0 0.0
  %769 = vmatmul.mubr.f32.gmra.mxu0 %v702
  %v770 = vpop.f32.mrf.mxu0
  %v771 = vadd.f32 %v698, %v770
  %v772 = vpop.f32.mrf.mxu0
  %773 = vdwg.mxu0
  %v774 = vand.u32 2147483647, %v771
  %v775 = vsub.f32 0.0, %v774
  %v776 = vmul.f32 %v775, 1.442695
  %v777 = vpow.pop %v776
  %v778 = vadd.f32 %v777, 1.0
  %v779 = vrcp.pop %v778
  %v780 = vmul.f32 %v777, %v779
  %vm781 = vcmp.ge.f32.partialorder %v771, 0.0
  %v782 = vsub.f32 1.0, %v780
  %v783 = vsel %vm781, %v782, %v780
  %v784 = vsub.f32 %v783, %v26
  %v785 = vsub.f32 %v783, %v27
  %v786 = vsub.f32 %v783, %v28
  %v787 = vsub.f32 %v783, %v29
  %v788 = vsub.f32 %v783, %v30
  %v789 = vsub.f32 %v783, %v31
  %v790 = vsub.f32 %v783, %v32
  %v791 = vsub.f32 %v783, %v33
  %v792 = vsub.f32 %v783, %v34
  %v793 = vsub.f32 %v783, %v35
  %v794 = vmul.f32 %v784, %v784
  %v795 = vmul.f32 %v785, %v785
  %v796 = vmul.f32 %v786, %v786
  %v797 = vmul.f32 %v787, %v787
  %v798 = vmul.f32 %v788, %v788
  %v799 = vmul.f32 %v789, %v789
  %v800 = vmul.f32 %v790, %v790
  %v801 = vmul.f32 %v791, %v791
  %v802 = vmul.f32 %v792, %v792
  %v803 = vmul.f32 %v793, %v793
  %v805 = vsel %vm95, %v37, 0
  %807 = vmatprep.subr.mxu0 0.0
  %808 = vmatpush1.msra.mxu0 0.0
  %809 = vmatprep.subr.mxu0 0.0
  %810 = vmatpush1.msra.mxu0 0.0
  %811 = vmatprep.subr.mxu0 0.0
  %812 = vmatpush1.msra.mxu0 0.0
  %813 = vmatprep.subr.mxu0 0.0
  %814 = vmatpush1.msra.mxu0 0.0
  %815 = vmatprep.subr.mxu0 0.0
  %816 = vmatpush1.msra.mxu0 0.0
  %817 = vmatprep.subr.mxu0 0.0
  %818 = vmatpush1.msra.mxu0 0.0
  %819 = vmatprep.subr.mxu0 0.0
  %820 = vmatpush1.msra.mxu0 %v803
  %821 = vmatprep.subr.mxu0 0.0
  %822 = vmatpush1.msra.mxu0 %v802
  %823 = vmatprep.subr.mxu0 0.0
  %824 = vmatpush1.msra.mxu0 %v801
  %825 = vmatprep.subr.mxu0 0.0
  %826 = vmatpush1.msra.mxu0 %v800
  %827 = vmatprep.subr.mxu0 0.0
  %828 = vmatpush1.msra.mxu0 %v799
  %829 = vmatprep.subr.mxu0 0.0
  %830 = vmatpush1.msra.mxu0 %v798
  %831 = vmatprep.subr.mxu0 0.0
  %832 = vmatpush1.msra.mxu0 %v797
  %833 = vmatprep.subr.mxu0 0.0
  %834 = vmatpush1.msra.mxu0 %v796
  %835 = vmatprep.subr.mxu0 0.0
  %836 = vmatpush1.msra.mxu0 %v795
  %837 = vmatprep.subr.mxu0 0.0
  %838 = vmatpush1.msra.mxu0 %v794
  %839 = vmatprep.subr.mxu0 0.0
  %840 = vmatpush2.msra.mxu0 0.0
  %841 = vmatprep.subr.mxu0 0.0
  %842 = vmatpush2.msra.mxu0 0.0
  %843 = vmatprep.subr.mxu0 0.0
  %844 = vmatpush2.msra.mxu0 0.0
  %845 = vmatprep.subr.mxu0 0.0
  %846 = vmatpush2.msra.mxu0 0.0
  %847 = vmatprep.subr.mxu0 0.0
  %848 = vmatpush2.msra.mxu0 0.0
  %849 = vmatprep.subr.mxu0 0.0
  %850 = vmatpush2.msra.mxu0 0.0
  %851 = vmatprep.subr.mxu0 0.0
  %852 = vmatpush2.msra.mxu0 0.0
  %853 = vmatprep.subr.mxu0 0.0
  %854 = vmatpush2.msra.mxu0 0.0
  %855 = vmatprep.subr.mxu0 0.0
  %856 = vmatpush2.msra.mxu0 0.0
  %857 = vmatprep.subr.mxu0 0.0
  %858 = vmatpush2.msra.mxu0 0.0
  %859 = vmatprep.subr.mxu0 0.0
  %860 = vmatpush2.msra.mxu0 0.0
  %861 = vmatprep.subr.mxu0 0.0
  %862 = vmatpush2.msra.mxu0 0.0
  %863 = vmatprep.subr.mxu0 0.0
  %864 = vmatpush2.msra.mxu0 0.0
  %865 = vmatprep.subr.mxu0 0.0
  %866 = vmatpush2.msra.mxu0 0.0
  %867 = vmatprep.subr.mxu0 0.0
  %868 = vmatpush2.msra.mxu0 0.0
  %869 = vmatprep.subr.mxu0 0.0
  %870 = vmatpush2.msra.mxu0 0.0
  %871 = vmatprep.mubr.f32.mxu0 0.0
  %872 = vmatmul.mubr.f32.gmra.mxu0 %v805
  %v873 = vpop.f32.mrf.mxu0
  %v874 = vadd.f32 0.0, %v873
  %v875 = vpop.f32.mrf.mxu0
  %876 = vdwg.mxu0
  %v877 = vadd.f32 %v166, %v874
  %v878 = vadd.f32 %v877, %v172
  %v879 = vmax.f32 %v878, 0.0
  %880 = vmatprep.subr.mxu0 0.0
  %881 = vmatpush1.msra.mxu0 0.0
  %882 = vmatprep.subr.mxu0 0.0
  %883 = vmatpush1.msra.mxu0 0.0
  %884 = vmatprep.subr.mxu0 0.0
  %885 = vmatpush1.msra.mxu0 0.0
  %886 = vmatprep.subr.mxu0 0.0
  %887 = vmatpush1.msra.mxu0 0.0
  %888 = vmatprep.subr.mxu0 0.0
  %889 = vmatpush1.msra.mxu0 0.0
  %890 = vmatprep.subr.mxu0 0.0
  %891 = vmatpush1.msra.mxu0 0.0
  %892 = vmatprep.subr.mxu0 0.0
  %893 = vmatpush1.msra.mxu0 0.0
  %894 = vmatprep.subr.mxu0 0.0
  %895 = vmatpush1.msra.mxu0 0.0
  %896 = vmatprep.subr.mxu0 0.0
  %897 = vmatpush1.msra.mxu0 0.0
  %898 = vmatprep.subr.mxu0 0.0
  %899 = vmatpush1.msra.mxu0 0.0
  %900 = vmatprep.subr.mxu0 0.0
  %901 = vmatpush1.msra.mxu0 0.0
  %902 = vmatprep.subr.mxu0 0.0
  %903 = vmatpush1.msra.mxu0 0.0
  %904 = vmatprep.subr.mxu0 0.0
  %905 = vmatpush1.msra.mxu0 0.0
  %906 = vmatprep.subr.mxu0 0.0
  %907 = vmatpush1.msra.mxu0 0.0
  %908 = vmatprep.subr.mxu0 0.0
  %909 = vmatpush1.msra.mxu0 0.0
  %910 = vmatprep.subr.mxu0 0.0
  %911 = vmatpush1.msra.mxu0 %v879
  %912 = vmatprep.subr.mxu0 0.0
  %913 = vmatpush2.msra.mxu0 0.0
  %914 = vmatprep.subr.mxu0 0.0
  %915 = vmatpush2.msra.mxu0 0.0
  %916 = vmatprep.subr.mxu0 0.0
  %917 = vmatpush2.msra.mxu0 0.0
  %918 = vmatprep.subr.mxu0 0.0
  %919 = vmatpush2.msra.mxu0 0.0
  %920 = vmatprep.subr.mxu0 0.0
  %921 = vmatpush2.msra.mxu0 0.0
  %922 = vmatprep.subr.mxu0 0.0
  %923 = vmatpush2.msra.mxu0 0.0
  %924 = vmatprep.subr.mxu0 0.0
  %925 = vmatpush2.msra.mxu0 0.0
  %926 = vmatprep.subr.mxu0 0.0
  %927 = vmatpush2.msra.mxu0 0.0
  %928 = vmatprep.subr.mxu0 0.0
  %929 = vmatpush2.msra.mxu0 0.0
  %930 = vmatprep.subr.mxu0 0.0
  %931 = vmatpush2.msra.mxu0 0.0
  %932 = vmatprep.subr.mxu0 0.0
  %933 = vmatpush2.msra.mxu0 0.0
  %934 = vmatprep.subr.mxu0 0.0
  %935 = vmatpush2.msra.mxu0 0.0
  %936 = vmatprep.subr.mxu0 0.0
  %937 = vmatpush2.msra.mxu0 0.0
  %938 = vmatprep.subr.mxu0 0.0
  %939 = vmatpush2.msra.mxu0 0.0
  %940 = vmatprep.subr.mxu0 0.0
  %941 = vmatpush2.msra.mxu0 0.0
  %942 = vmatprep.subr.mxu0 0.0
  %943 = vmatpush2.msra.mxu0 0.0
  %944 = vmatprep.mubr.f32.mxu0 0.0
  %945 = vmatmul.mubr.f32.gmra.mxu0 %v278
  %v946 = vpop.f32.mrf.mxu0
  %v947 = vadd.f32 %v179, %v946
  %v948 = vpop.f32.mrf.mxu0
  %949 = vmatprep.mubr.f32.mxu0 0.0
  %950 = vmatmul.mubr.f32.gmra.mxu0 %v281
  %v951 = vpop.f32.mrf.mxu0
  %v952 = vadd.f32 %v184, %v951
  %v953 = vpop.f32.mrf.mxu0
  %954 = vmatprep.mubr.f32.mxu0 0.0
  %955 = vmatmul.mubr.f32.gmra.mxu0 %v284
  %v956 = vpop.f32.mrf.mxu0
  %v957 = vadd.f32 %v189, %v956
  %v958 = vpop.f32.mrf.mxu0
  %959 = vmatprep.mubr.f32.mxu0 0.0
  %960 = vmatmul.mubr.f32.gmra.mxu0 %v287
  %v961 = vpop.f32.mrf.mxu0
  %v962 = vadd.f32 %v194, %v961
  %v963 = vpop.f32.mrf.mxu0
  %964 = vmatprep.mubr.f32.mxu0 0.0
  %965 = vmatmul.mubr.f32.gmra.mxu0 %v290
  %v966 = vpop.f32.mrf.mxu0
  %v967 = vadd.f32 %v199, %v966
  %v968 = vpop.f32.mrf.mxu0
  %969 = vmatprep.mubr.f32.mxu0 0.0
  %970 = vmatmul.mubr.f32.gmra.mxu0 %v293
  %v971 = vpop.f32.mrf.mxu0
  %v972 = vadd.f32 %v204, %v971
  %v973 = vpop.f32.mrf.mxu0
  %974 = vmatprep.mubr.f32.mxu0 0.0
  %975 = vmatmul.mubr.f32.gmra.mxu0 %v296
  %v976 = vpop.f32.mrf.mxu0
  %v977 = vadd.f32 %v209, %v976
  %v978 = vpop.f32.mrf.mxu0
  %979 = vmatprep.mubr.f32.mxu0 0.0
  %980 = vmatmul.mubr.f32.gmra.mxu0 %v299
  %v981 = vpop.f32.mrf.mxu0
  %v982 = vadd.f32 %v214, %v981
  %v983 = vpop.f32.mrf.mxu0
  %984 = vmatprep.mubr.f32.mxu0 0.0
  %985 = vmatmul.mubr.f32.gmra.mxu0 %v302
  %v986 = vpop.f32.mrf.mxu0
  %v987 = vadd.f32 %v219, %v986
  %v988 = vpop.f32.mrf.mxu0
  %989 = vmatprep.mubr.f32.mxu0 0.0
  %990 = vmatmul.mubr.f32.gmra.mxu0 %v305
  %v991 = vpop.f32.mrf.mxu0
  %v992 = vadd.f32 %v224, %v991
  %v993 = vpop.f32.mrf.mxu0
  %994 = vmatprep.mubr.f32.mxu0 0.0
  %995 = vmatmul.mubr.f32.gmra.mxu0 %v308
  %v996 = vpop.f32.mrf.mxu0
  %v997 = vadd.f32 %v229, %v996
  %v998 = vpop.f32.mrf.mxu0
  %999 = vmatprep.mubr.f32.mxu0 0.0
  %1000 = vmatmul.mubr.f32.gmra.mxu0 %v311
  %v1001 = vpop.f32.mrf.mxu0
  %v1002 = vadd.f32 %v234, %v1001
  %v1003 = vpop.f32.mrf.mxu0
  %1004 = vmatprep.mubr.f32.mxu0 0.0
  %1005 = vmatmul.mubr.f32.gmra.mxu0 %v314
  %v1006 = vpop.f32.mrf.mxu0
  %v1007 = vadd.f32 %v239, %v1006
  %v1008 = vpop.f32.mrf.mxu0
  %1009 = vmatprep.mubr.f32.mxu0 0.0
  %1010 = vmatmul.mubr.f32.gmra.mxu0 %v317
  %v1011 = vpop.f32.mrf.mxu0
  %v1012 = vadd.f32 %v244, %v1011
  %v1013 = vpop.f32.mrf.mxu0
  %1014 = vmatprep.mubr.f32.mxu0 0.0
  %1015 = vmatmul.mubr.f32.gmra.mxu0 %v320
  %v1016 = vpop.f32.mrf.mxu0
  %v1017 = vadd.f32 %v249, %v1016
  %v1018 = vpop.f32.mrf.mxu0
  %1019 = vmatprep.mubr.f32.mxu0 0.0
  %1020 = vmatmul.mubr.f32.gmra.mxu0 %v323
  %v1021 = vpop.f32.mrf.mxu0
  %v1022 = vadd.f32 %v254, %v1021
  %v1023 = vpop.f32.mrf.mxu0
  %1024 = vmatprep.mubr.f32.mxu0 0.0
  %1025 = vmatmul.mubr.f32.gmra.mxu0 %v326
  %v1026 = vpop.f32.mrf.mxu0
  %v1027 = vadd.f32 %v259, %v1026
  %v1028 = vpop.f32.mrf.mxu0
  %1029 = vmatprep.mubr.f32.mxu0 0.0
  %1030 = vmatmul.mubr.f32.gmra.mxu0 %v329
  %v1031 = vpop.f32.mrf.mxu0
  %v1032 = vadd.f32 %v264, %v1031
  %v1033 = vpop.f32.mrf.mxu0
  %1034 = vmatprep.mubr.f32.mxu0 0.0
  %1035 = vmatmul.mubr.f32.gmra.mxu0 %v332
  %v1036 = vpop.f32.mrf.mxu0
  %v1037 = vadd.f32 %v269, %v1036
  %v1038 = vpop.f32.mrf.mxu0
  %1039 = vmatprep.mubr.f32.mxu0 0.0
  %1040 = vmatmul.mubr.f32.gmra.mxu0 %v335
  %v1041 = vpop.f32.mrf.mxu0
  %v1042 = vadd.f32 %v274, %v1041
  %v1043 = vpop.f32.mrf.mxu0
  %1044 = vdwg.mxu0
  %v1045 = vmax.f32 %v947, 0.0
  %v1046 = vmax.f32 %v952, 0.0
  %v1047 = vmax.f32 %v957, 0.0
  %v1048 = vmax.f32 %v962, 0.0
  %v1049 = vmax.f32 %v967, 0.0
  %v1050 = vmax.f32 %v972, 0.0
  %v1051 = vmax.f32 %v977, 0.0
  %v1052 = vmax.f32 %v982, 0.0
  %v1053 = vmax.f32 %v987, 0.0
  %v1054 = vmax.f32 %v992, 0.0
  %v1055 = vmax.f32 %v997, 0.0
  %v1056 = vmax.f32 %v1002, 0.0
  %v1057 = vmax.f32 %v1007, 0.0
  %v1058 = vmax.f32 %v1012, 0.0
  %v1059 = vmax.f32 %v1017, 0.0
  %v1060 = vmax.f32 %v1022, 0.0
  %v1061 = vmax.f32 %v1027, 0.0
  %v1062 = vmax.f32 %v1032, 0.0
  %v1063 = vmax.f32 %v1037, 0.0
  %v1064 = vmax.f32 %v1042, 0.0
  %1066 = vset.pattern.permute.xlu0 0
  %1067 = vperm.xlu0 %1066, %v69
  %v1068 = vpop.permute.xlu0 %1067
  %v1071 = vsel %vm527, %v61, 0
  %1073 = vmatprep.subr.mxu0 0.0
  %1074 = vmatpush1.msra.mxu0 %v1060
  %1075 = vmatprep.subr.mxu0 0.0
  %1076 = vmatpush1.msra.mxu0 %v1059
  %1077 = vmatprep.subr.mxu0 0.0
  %1078 = vmatpush1.msra.mxu0 %v1058
  %1079 = vmatprep.subr.mxu0 0.0
  %1080 = vmatpush1.msra.mxu0 %v1057
  %1081 = vmatprep.subr.mxu0 0.0
  %1082 = vmatpush1.msra.mxu0 %v1056
  %1083 = vmatprep.subr.mxu0 0.0
  %1084 = vmatpush1.msra.mxu0 %v1055
  %1085 = vmatprep.subr.mxu0 0.0
  %1086 = vmatpush1.msra.mxu0 %v1054
  %1087 = vmatprep.subr.mxu0 0.0
  %1088 = vmatpush1.msra.mxu0 %v1053
  %1089 = vmatprep.subr.mxu0 0.0
  %1090 = vmatpush1.msra.mxu0 %v1052
  %1091 = vmatprep.subr.mxu0 0.0
  %1092 = vmatpush1.msra.mxu0 %v1051
  %1093 = vmatprep.subr.mxu0 0.0
  %1094 = vmatpush1.msra.mxu0 %v1050
  %1095 = vmatprep.subr.mxu0 0.0
  %1096 = vmatpush1.msra.mxu0 %v1049
  %1097 = vmatprep.subr.mxu0 0.0
  %1098 = vmatpush1.msra.mxu0 %v1048
  %1099 = vmatprep.subr.mxu0 0.0
  %1100 = vmatpush1.msra.mxu0 %v1047
  %1101 = vmatprep.subr.mxu0 0.0
  %1102 = vmatpush1.msra.mxu0 %v1046
  %1103 = vmatprep.subr.mxu0 0.0
  %1104 = vmatpush1.msra.mxu0 %v1045
  %1105 = vmatprep.subr.mxu0 0.0
  %1106 = vmatpush2.msra.mxu0 0.0
  %1107 = vmatprep.subr.mxu0 0.0
  %1108 = vmatpush2.msra.mxu0 0.0
  %1109 = vmatprep.subr.mxu0 0.0
  %1110 = vmatpush2.msra.mxu0 0.0
  %1111 = vmatprep.subr.mxu0 0.0
  %1112 = vmatpush2.msra.mxu0 0.0
  %1113 = vmatprep.subr.mxu0 0.0
  %1114 = vmatpush2.msra.mxu0 0.0
  %1115 = vmatprep.subr.mxu0 0.0
  %1116 = vmatpush2.msra.mxu0 0.0
  %1117 = vmatprep.subr.mxu0 0.0
  %1118 = vmatpush2.msra.mxu0 0.0
  %1119 = vmatprep.subr.mxu0 0.0
  %1120 = vmatpush2.msra.mxu0 0.0
  %1121 = vmatprep.subr.mxu0 0.0
  %1122 = vmatpush2.msra.mxu0 0.0
  %1123 = vmatprep.subr.mxu0 0.0
  %1124 = vmatpush2.msra.mxu0 0.0
  %1125 = vmatprep.subr.mxu0 0.0
  %1126 = vmatpush2.msra.mxu0 0.0
  %1127 = vmatprep.subr.mxu0 0.0
  %1128 = vmatpush2.msra.mxu0 0.0
  %1129 = vmatprep.subr.mxu0 0.0
  %1130 = vmatpush2.msra.mxu0 %v1064
  %1131 = vmatprep.subr.mxu0 0.0
  %1132 = vmatpush2.msra.mxu0 %v1063
  %1133 = vmatprep.subr.mxu0 0.0
  %1134 = vmatpush2.msra.mxu0 %v1062
  %1135 = vmatprep.subr.mxu0 0.0
  %1136 = vmatpush2.msra.mxu0 %v1061
  %1137 = vmatprep.mubr.f32.mxu0 %v1071
  %1138 = vmatmul.mubr.f32.gmra.mxu0 %v60
  %v1139 = vpop.f32.mrf.mxu0
  %v1140 = vadd.f32 %v1068, %v1139
  %v1141 = vpop.f32.mrf.mxu0
  %1142 = vdwg.mxu0
  %v1143 = vmax.f32 %v1140, 0.0
  %1145 = vset.pattern.permute.xlu0 0
  %1146 = vperm.xlu0 %1145, %v92
  %v1147 = vpop.permute.xlu0 %1146
  %1150 = vset.pattern.permute.xlu0 0
  %1151 = vperm.xlu0 %1150, %v93
  %v1152 = vpop.permute.xlu0 %1151
  %v1155 = vsel %vm276, %v64, 0
  %v1158 = vsel %vm276, %v65, 0
  %1160 = vmatprep.subr.mxu0 0.0
  %1161 = vmatpush1.msra.mxu0 0.0
  %1162 = vmatprep.subr.mxu0 0.0
  %1163 = vmatpush1.msra.mxu0 0.0
  %1164 = vmatprep.subr.mxu0 0.0
  %1165 = vmatpush1.msra.mxu0 0.0
  %1166 = vmatprep.subr.mxu0 0.0
  %1167 = vmatpush1.msra.mxu0 0.0
  %1168 = vmatprep.subr.mxu0 0.0
  %1169 = vmatpush1.msra.mxu0 0.0
  %1170 = vmatprep.subr.mxu0 0.0
  %1171 = vmatpush1.msra.mxu0 0.0
  %1172 = vmatprep.subr.mxu0 0.0
  %1173 = vmatpush1.msra.mxu0 0.0
  %1174 = vmatprep.subr.mxu0 0.0
  %1175 = vmatpush1.msra.mxu0 0.0
  %1176 = vmatprep.subr.mxu0 0.0
  %1177 = vmatpush1.msra.mxu0 0.0
  %1178 = vmatprep.subr.mxu0 0.0
  %1179 = vmatpush1.msra.mxu0 0.0
  %1180 = vmatprep.subr.mxu0 0.0
  %1181 = vmatpush1.msra.mxu0 0.0
  %1182 = vmatprep.subr.mxu0 0.0
  %1183 = vmatpush1.msra.mxu0 0.0
  %1184 = vmatprep.subr.mxu0 0.0
  %1185 = vmatpush1.msra.mxu0 0.0
  %1186 = vmatprep.subr.mxu0 0.0
  %1187 = vmatpush1.msra.mxu0 0.0
  %1188 = vmatprep.subr.mxu0 0.0
  %1189 = vmatpush1.msra.mxu0 0.0
  %1190 = vmatprep.subr.mxu0 0.0
  %1191 = vmatpush1.msra.mxu0 %v1143
  %1192 = vmatprep.subr.mxu0 0.0
  %1193 = vmatpush2.msra.mxu0 0.0
  %1194 = vmatprep.subr.mxu0 0.0
  %1195 = vmatpush2.msra.mxu0 0.0
  %1196 = vmatprep.subr.mxu0 0.0
  %1197 = vmatpush2.msra.mxu0 0.0
  %1198 = vmatprep.subr.mxu0 0.0
  %1199 = vmatpush2.msra.mxu0 0.0
  %1200 = vmatprep.subr.mxu0 0.0
  %1201 = vmatpush2.msra.mxu0 0.0
  %1202 = vmatprep.subr.mxu0 0.0
  %1203 = vmatpush2.msra.mxu0 0.0
  %1204 = vmatprep.subr.mxu0 0.0
  %1205 = vmatpush2.msra.mxu0 0.0
  %1206 = vmatprep.subr.mxu0 0.0
  %1207 = vmatpush2.msra.mxu0 0.0
  %1208 = vmatprep.subr.mxu0 0.0
  %1209 = vmatpush2.msra.mxu0 0.0
  %1210 = vmatprep.subr.mxu0 0.0
  %1211 = vmatpush2.msra.mxu0 0.0
  %1212 = vmatprep.subr.mxu0 0.0
  %1213 = vmatpush2.msra.mxu0 0.0
  %1214 = vmatprep.subr.mxu0 0.0
  %1215 = vmatpush2.msra.mxu0 0.0
  %1216 = vmatprep.subr.mxu0 0.0
  %1217 = vmatpush2.msra.mxu0 0.0
  %1218 = vmatprep.subr.mxu0 0.0
  %1219 = vmatpush2.msra.mxu0 0.0
  %1220 = vmatprep.subr.mxu0 0.0
  %1221 = vmatpush2.msra.mxu0 0.0
  %1222 = vmatprep.subr.mxu0 0.0
  %1223 = vmatpush2.msra.mxu0 0.0
  %1224 = vmatprep.mubr.f32.mxu0 0.0
  %1225 = vmatmul.mubr.f32.gmra.mxu0 %v1155
  %v1226 = vpop.f32.mrf.mxu0
  %v1227 = vadd.f32 %v1147, %v1226
  %v1228 = vpop.f32.mrf.mxu0
  %1229 = vmatprep.mubr.f32.mxu0 0.0
  %1230 = vmatmul.mubr.f32.gmra.mxu0 %v1158
  %v1231 = vpop.f32.mrf.mxu0
  %v1232 = vadd.f32 %v1152, %v1231
  %v1233 = vpop.f32.mrf.mxu0
  %1234 = vdwg.mxu0
  %v1235 = vmax.f32 %v1227, 0.0
  %v1236 = vmax.f32 %v1232, 0.0
  %1237 = vmatprep.subr.mxu0 0.0
  %1238 = vmatpush1.msra.mxu0 0.0
  %1239 = vmatprep.subr.mxu0 0.0
  %1240 = vmatpush1.msra.mxu0 0.0
  %1241 = vmatprep.subr.mxu0 0.0
  %1242 = vmatpush1.msra.mxu0 0.0
  %1243 = vmatprep.subr.mxu0 0.0
  %1244 = vmatpush1.msra.mxu0 0.0
  %1245 = vmatprep.subr.mxu0 0.0
  %1246 = vmatpush1.msra.mxu0 0.0
  %1247 = vmatprep.subr.mxu0 0.0
  %1248 = vmatpush1.msra.mxu0 0.0
  %1249 = vmatprep.subr.mxu0 0.0
  %1250 = vmatpush1.msra.mxu0 0.0
  %1251 = vmatprep.subr.mxu0 0.0
  %1252 = vmatpush1.msra.mxu0 0.0
  %1253 = vmatprep.subr.mxu0 0.0
  %1254 = vmatpush1.msra.mxu0 0.0
  %1255 = vmatprep.subr.mxu0 0.0
  %1256 = vmatpush1.msra.mxu0 0.0
  %1257 = vmatprep.subr.mxu0 0.0
  %1258 = vmatpush1.msra.mxu0 0.0
  %1259 = vmatprep.subr.mxu0 0.0
  %1260 = vmatpush1.msra.mxu0 0.0
  %1261 = vmatprep.subr.mxu0 0.0
  %1262 = vmatpush1.msra.mxu0 0.0
  %1263 = vmatprep.subr.mxu0 0.0
  %1264 = vmatpush1.msra.mxu0 0.0
  %1265 = vmatprep.subr.mxu0 0.0
  %1266 = vmatpush1.msra.mxu0 %v1236
  %1267 = vmatprep.subr.mxu0 0.0
  %1268 = vmatpush1.msra.mxu0 %v1235
  %1269 = vmatprep.subr.mxu0 0.0
  %1270 = vmatpush2.msra.mxu0 0.0
  %1271 = vmatprep.subr.mxu0 0.0
  %1272 = vmatpush2.msra.mxu0 0.0
  %1273 = vmatprep.subr.mxu0 0.0
  %1274 = vmatpush2.msra.mxu0 0.0
  %1275 = vmatprep.subr.mxu0 0.0
  %1276 = vmatpush2.msra.mxu0 0.0
  %1277 = vmatprep.subr.mxu0 0.0
  %1278 = vmatpush2.msra.mxu0 0.0
  %1279 = vmatprep.subr.mxu0 0.0
  %1280 = vmatpush2.msra.mxu0 0.0
  %1281 = vmatprep.subr.mxu0 0.0
  %1282 = vmatpush2.msra.mxu0 0.0
  %1283 = vmatprep.subr.mxu0 0.0
  %1284 = vmatpush2.msra.mxu0 0.0
  %1285 = vmatprep.subr.mxu0 0.0
  %1286 = vmatpush2.msra.mxu0 0.0
  %1287 = vmatprep.subr.mxu0 0.0
  %1288 = vmatpush2.msra.mxu0 0.0
  %1289 = vmatprep.subr.mxu0 0.0
  %1290 = vmatpush2.msra.mxu0 0.0
  %1291 = vmatprep.subr.mxu0 0.0
  %1292 = vmatpush2.msra.mxu0 0.0
  %1293 = vmatprep.subr.mxu0 0.0
  %1294 = vmatpush2.msra.mxu0 0.0
  %1295 = vmatprep.subr.mxu0 0.0
  %1296 = vmatpush2.msra.mxu0 0.0
  %1297 = vmatprep.subr.mxu0 0.0
  %1298 = vmatpush2.msra.mxu0 0.0
  %1299 = vmatprep.subr.mxu0 0.0
  %1300 = vmatpush2.msra.mxu0 0.0
  %1301 = vmatprep.mubr.f32.mxu0 0.0
  %1302 = vmatmul.mubr.f32.gmra.mxu0 %v702
  %v1303 = vpop.f32.mrf.mxu0
  %v1304 = vadd.f32 %v698, %v1303
  %v1305 = vpop.f32.mrf.mxu0
  %1306 = vdwg.mxu0
  %v1307 = vand.u32 2147483647, %v1304
  %v1308 = vsub.f32 0.0, %v1307
  %v1309 = vmul.f32 %v1308, 1.442695
  %v1310 = vpow.pop %v1309
  %v1311 = vadd.f32 %v1310, 1.0
  %v1312 = vrcp.pop %v1311
  %v1313 = vmul.f32 %v1310, %v1312
  %vm1314 = vcmp.ge.f32.partialorder %v1304, 0.0
  %v1315 = vsub.f32 1.0, %v1313
  %v1316 = vsel %vm1314, %v1315, %v1313
  %1317 = vst [vmem:[%s7] sm:$0xff] %v783
  %1318 = vst [vmem:[%s7 + $0x8] sm:$0xff] %v1316
  // Predicated region
  $region30: #{tranad_forward.1} parent=0 // pred_check
    _
  $region31: #{tranad_forward.1} parent=0 // pred_check_branch
    %1320 = sbr.rel (0) target = $region33
  $region32: #{tranad_forward.1} parent=0 // pred_region
    _
  $region33: #{tranad_forward.1} parent=0 // pred_fallthru
    _
  // Predicated region
  $region34: #{tranad_forward.1} parent=0 // pred_check
    _
  $region35: #{tranad_forward.1} parent=0 // pred_check_branch
    %1322 = sbr.rel (0) target = $region37
  $region36: #{tranad_forward.1} parent=0 // pred_region
    _
  $region37: #{tranad_forward.1} parent=0 // pred_fallthru
    _

</llo_original>
